<compile_context>
chip_gen: v7x
topology: tpu7x:2x2x1
jax: 0.10.0
libtpu: 0.0.40
codegen_flags: <defaults>
</compile_context>

<pallas_src>
import jax
import jax.numpy as jnp
from jax.experimental import pallas as pl
from jax.experimental.pallas import tpu as pltpu

HIDDEN = 1024
NUM_CLASSES = 11
OUT_PAD = 128          # lane-dense output width (>= NUM_CLASSES, multiple of 128)
BN_EPS = 1e-5
MAX_TK = 4096          # largest single K tile (bf16 W1 tile = 8 MiB); beyond -> K-tiled


def _round_up(n, m):
    return ((n + m - 1) // m) * m


def _preferred_tb():
    """256-row batch tiles on v6e/v7x (2x256 MXU), 128 on v5-class chips."""
    try:
        kind = jax.devices()[0].device_kind.lower()
    except Exception:
        kind = ""
    return 128 if "v5" in kind else 256


def _choose_k_tiling(feature_dim):
    d128 = _round_up(feature_dim, 128)
    tk = d128 if d128 <= MAX_TK else 2048
    d_pad = _round_up(feature_dim, tk)
    return tk, d_pad


# --------------------------------------------------------------------------- #
# Kernel: K-tiled GEMM1 (+folded BN bias) -> ReLU -> GEMM2, f32 accumulation.  #
# --------------------------------------------------------------------------- #
def mlp_kernel(x_ref, w1_ref, b1_ref, w2_ref, b2_ref, out_ref, acc_ref):
    k = pl.program_id(1)

    @pl.when(k == 0)
    def _():
        acc_ref[...] = jnp.zeros_like(acc_ref)

    # bf16 x bf16 -> f32 accumulate on the MXU.
    acc_ref[...] += jnp.dot(x_ref[...], w1_ref[...],
                            preferred_element_type=jnp.float32)

    @pl.when(k == pl.num_programs(1) - 1)
    def _():
        h = jnp.maximum(acc_ref[...] + b1_ref[...], 0.0)          # bias (BN folded) + ReLU
        # Dropout: identity (eval mode).
        o = jnp.dot(h.astype(jnp.bfloat16), w2_ref[...],
                    preferred_element_type=jnp.float32)           # (TB, 128)
        out_ref[...] = o + b2_ref[...]


# --------------------------------------------------------------------------- #
# One-time parameter preparation (hoisted out of the per-call forward path).   #
# --------------------------------------------------------------------------- #
def prepare_params(params):
    """Fold BatchNorm1d (eval) into Linear1, pad, and cast weights to bf16.

    Call ONCE per set of weights and cache the result; the forward pass only
    touches the activation tensor.
    """
    D = params["w1"].shape[0]
    tk, d_pad = _choose_k_tiling(D)

    scale = params["bn_gamma"] / jnp.sqrt(params["bn_var"] + BN_EPS)          # (1024,)
    w1_f = params["w1"] * scale[None, :]                                      # (D, 1024)
    b1_f = (params["b1"] - params["bn_mean"]) * scale + params["bn_beta"]     # (1024,)

    w1_bf = w1_f.astype(jnp.bfloat16)
    if d_pad != D:
        w1_p = jnp.zeros((d_pad, HIDDEN), jnp.bfloat16).at[:D, :].set(w1_bf)
    else:
        w1_p = w1_bf
    b1_p = b1_f.reshape(1, HIDDEN).astype(jnp.float32)
    w2_p = (jnp.zeros((HIDDEN, OUT_PAD), jnp.bfloat16)
            .at[:, :NUM_CLASSES].set(params["w2"].astype(jnp.bfloat16)))
    b2_p = jnp.zeros((1, OUT_PAD), jnp.float32).at[0, :NUM_CLASSES].set(params["b2"])

    return {"w1": w1_p, "b1": b1_p, "w2": w2_p, "b2": b2_p,
            "feature_dim": D, "d_pad": d_pad, "tk": tk}


# --------------------------------------------------------------------------- #
# Forward pass                                                                 #
# --------------------------------------------------------------------------- #
def cnn_video_classifier_forward(x, prep):
    """x: (B, feature_dim) float32  ->  (B, 11) float32 logits."""
    B, D = x.shape
    assert D == prep["feature_dim"], "feature_dim mismatch with prepared params"
    d_pad, tk = prep["d_pad"], prep["tk"]
    k_steps = d_pad // tk

    # ---- batch tiling ------------------------------------------------------
    tb_pref = _preferred_tb()
    if B >= tb_pref:
        TB = tb_pref
    else:
        TB = _round_up(max(B, 16), 16)       # bf16 sublane packing
    B_pad = _round_up(B, TB)

    # ---- activation cast / pad (only when misaligned) ----------------------
    x_bf = x.astype(jnp.bfloat16)
    if B_pad != B or d_pad != D:
        x_p = jnp.zeros((B_pad, d_pad), jnp.bfloat16).at[:B, :D].set(x_bf)
    else:
        x_p = x_bf

    grid = (B_pad // TB, k_steps)

    # ---- explicit VMEM budget ----------------------------------------------
    w1_bufs = 1 if k_steps == 1 else 2       # constant index -> single buffer
    vmem_bytes = (
        w1_bufs * tk * HIDDEN * 2            # W1 tiles (bf16)
        + HIDDEN * OUT_PAD * 2               # W2 (bf16), single-buffered
        + (HIDDEN + OUT_PAD) * 4             # biases (f32), single-buffered
        + 2 * TB * tk * 2                    # x tile (bf16), double-buffered
        + 2 * TB * OUT_PAD * 4               # out tile (f32), double-buffered
        + TB * HIDDEN * 4                    # f32 accumulator scratch
    )
    vmem_limit = int(min(max(vmem_bytes + (8 << 20), 32 << 20), 64 << 20))

    # ---- BlockSpecs ---------------------------------------------------------
    if k_steps == 1:
        w1_spec = pl.BlockSpec((tk, HIDDEN), lambda i, k: (k, 0),
                               pipeline_mode=pl.Buffered(1))
    else:
        w1_spec = pl.BlockSpec((tk, HIDDEN), lambda i, k: (k, 0))
    in_specs = [
        pl.BlockSpec((TB, tk), lambda i, k: (i, k)),                     # x tile
        w1_spec,                                                         # W1 (BN folded)
        pl.BlockSpec((1, HIDDEN), lambda i, k: (0, 0),
                     pipeline_mode=pl.Buffered(1)),                      # b1
        pl.BlockSpec((HIDDEN, OUT_PAD), lambda i, k: (0, 0),
                     pipeline_mode=pl.Buffered(1)),                      # W2
        pl.BlockSpec((1, OUT_PAD), lambda i, k: (0, 0),
                     pipeline_mode=pl.Buffered(1)),                      # b2
    ]

    out_p = pl.pallas_call(
        mlp_kernel,
        out_shape=jax.ShapeDtypeStruct((B_pad, OUT_PAD), jnp.float32),
        grid_spec=pltpu.PrefetchScalarGridSpec(
            num_scalar_prefetch=0,
            grid=grid,
            in_specs=in_specs,
            out_specs=pl.BlockSpec((TB, OUT_PAD), lambda i, k: (i, 0)),
            scratch_shapes=[pltpu.VMEM((TB, HIDDEN), jnp.float32)],
        ),
        compiler_params=pltpu.CompilerParams(
            dimension_semantics=("parallel", "arbitrary"),
            vmem_limit_bytes=vmem_limit,
        ),
    )(x_p, prep["w1"], prep["b1"], prep["w2"], prep["b2"])

    return out_p[:B, :NUM_CLASSES]


# --------------------------------------------------------------------------- #
# Params / reference                                                           #
# --------------------------------------------------------------------------- #
def init_params(key, feature_dim):
    """PyTorch-style init: Linear U(-1/sqrt(fan_in), 1/sqrt(fan_in)); BN stats nontrivial."""
    ks = jax.random.split(key, 8)
    s1 = 1.0 / jnp.sqrt(jnp.float32(feature_dim))
    s2 = 1.0 / jnp.sqrt(jnp.float32(HIDDEN))
    u = lambda k, shp, s: jax.random.uniform(k, shp, jnp.float32, -s, s)
    return {
        # weights stored (in_features, out_features) = PyTorch weight.T
        "w1": u(ks[0], (feature_dim, HIDDEN), s1),
        "b1": u(ks[1], (HIDDEN,), s1),
        "bn_gamma": 1.0 + 0.1 * jax.random.normal(ks[2], (HIDDEN,), jnp.float32),
        "bn_beta": 0.1 * jax.random.normal(ks[3], (HIDDEN,), jnp.float32),
        "bn_mean": 0.1 * jax.random.normal(ks[4], (HIDDEN,), jnp.float32),
        "bn_var": jnp.abs(1.0 + 0.1 * jax.random.normal(ks[5], (HIDDEN,), jnp.float32)),
        "w2": u(ks[6], (HIDDEN, NUM_CLASSES), s2),
        "b2": u(ks[7], (NUM_CLASSES,), s2),
    }


def reference_forward(x, params):
    """Pure-JAX f32 reference: Linear -> BatchNorm1d(eval) -> ReLU -> Dropout(id) -> Linear."""
    h = x @ params["w1"] + params["b1"]
    h = (h - params["bn_mean"]) / jnp.sqrt(params["bn_var"] + BN_EPS)
    h = h * params["bn_gamma"] + params["bn_beta"]
    h = jnp.maximum(h, 0.0)
    return h @ params["w2"] + params["b2"]


if __name__ == "__main__":
    B, FEATURE_DIM = 8, 256

    key = jax.random.PRNGKey(0)
    k_x, k_p = jax.random.split(key)
    x = jax.random.normal(k_x, (B, FEATURE_DIM), jnp.float32)
    params = init_params(k_p, FEATURE_DIM)

    prep = prepare_params(params)          # one-time fold/pad/cast; cache in real use
    out = cnn_video_classifier_forward(x, prep)
    out = jax.block_until_ready(out)

    ref = reference_forward(x, params)
    assert out.shape == (B, NUM_CLASSES), out.shape
    max_err = float(jnp.max(jnp.abs(out - ref)))
    # bf16 operands, f32 accumulation -> loosened tolerance vs the f32 reference.
    assert jnp.allclose(out, ref, rtol=5e-2, atol=5e-2), f"mismatch vs reference, max_err={max_err}"

    print("KERNEL_OK")
</pallas_src>

<mosaic_0001>
module attributes {stable_mosaic.version = 11 : i64} {
  func.func @mlp_kernel(%arg0: i32, %arg1: i32, %arg2: memref<16x256xbf16, #tpu.memory_space<vmem>>, %arg3: memref<256x1024xbf16, #tpu.memory_space<vmem>>, %arg4: memref<1x1024xf32, #tpu.memory_space<vmem>>, %arg5: memref<1024x128xbf16, #tpu.memory_space<vmem>>, %arg6: memref<1x128xf32, #tpu.memory_space<vmem>>, %arg7: memref<16x128xf32, #tpu.memory_space<vmem>>, %arg8: memref<16x1024xf32, #tpu.memory_space<vmem>>) attributes {dimension_semantics = [#tpu.dimension_semantics<parallel>, #tpu.dimension_semantics<arbitrary>], iteration_bounds = array<i64: 1, 1>, scalar_prefetch = 0 : i64, scratch_operands = 1 : i64, tpu.core_type = #tpu.core_type<tc>, window_params = [{transform_indices = @transform_0, window_bounds = array<i64: 16, 256>}, {pipeline_mode = #tpu.pipeline_mode<synchronous>, transform_indices = @transform_1, window_bounds = array<i64: 256, 1024>}, {pipeline_mode = #tpu.pipeline_mode<synchronous>, transform_indices = @transform_2, window_bounds = array<i64: 1, 1024>}, {pipeline_mode = #tpu.pipeline_mode<synchronous>, transform_indices = @transform_3, window_bounds = array<i64: 1024, 128>}, {pipeline_mode = #tpu.pipeline_mode<synchronous>, transform_indices = @transform_4, window_bounds = array<i64: 1, 128>}, {transform_indices = @transform_5, window_bounds = array<i64: 16, 128>}]} {
    %c0_i32 = arith.constant 0 : i32
    %0 = arith.cmpi eq, %arg1, %c0_i32 : i32
    %1 = arith.extui %0 : i1 to i32
    %c0_i32_0 = arith.constant 0 : i32
    %2 = arith.cmpi ne, %1, %c0_i32_0 : i32
    scf.if %2 {
      %cst_10 = arith.constant 0.000000e+00 : f32
      %12 = vector.broadcast %cst_10 : f32 to vector<16x1024xf32>
      %c0_11 = arith.constant 0 : index
      %c0_12 = arith.constant 0 : index
      %13 = vector.load %arg8[%c0_11, %c0_12] : memref<16x1024xf32, #tpu.memory_space<vmem>>, vector<16x1024xf32>
      tpu.vector_store %arg8[%c0_11, %c0_12], %12 {strides = array<i32>} : memref<16x1024xf32, #tpu.memory_space<vmem>>, vector<16x1024xf32>,
    } else {
    }
    %c0 = arith.constant 0 : index
    %c0_1 = arith.constant 0 : index
    %3 = vector.load %arg8[%c0, %c0_1] : memref<16x1024xf32, #tpu.memory_space<vmem>>, vector<16x1024xf32>
    %c0_2 = arith.constant 0 : index
    %c0_3 = arith.constant 0 : index
    %4 = vector.load %arg2[%c0_2, %c0_3] : memref<16x256xbf16, #tpu.memory_space<vmem>>, vector<16x256xbf16>
    %c0_4 = arith.constant 0 : index
    %c0_5 = arith.constant 0 : index
    %5 = vector.load %arg3[%c0_4, %c0_5] : memref<256x1024xbf16, #tpu.memory_space<vmem>>, vector<256x1024xbf16>
    %cst = arith.constant dense<0.000000e+00> : vector<16x1024xf32>
    %6 = tpu.matmul %4, %5, %cst {dimension_numbers = #tpu.dot_dimension_numbers<[1], [0], [0], [1], [0, 0, 1, 1], [], []>} : vector<16x256xbf16>, vector<256x1024xbf16>, vector<16x1024xf32> -> vector<16x1024xf32>
    %7 = arith.addf %3, %6 : vector<16x1024xf32>
    %c0_6 = arith.constant 0 : index
    %c0_7 = arith.constant 0 : index
    %8 = vector.load %arg8[%c0_6, %c0_7] : memref<16x1024xf32, #tpu.memory_space<vmem>>, vector<16x1024xf32>
    tpu.vector_store %arg8[%c0_6, %c0_7], %7 {strides = array<i32>} : memref<16x1024xf32, #tpu.memory_space<vmem>>, vector<16x1024xf32>,
    %c0_i32_8 = arith.constant 0 : i32
    %9 = arith.cmpi eq, %arg1, %c0_i32_8 : i32
    %10 = arith.extui %9 : i1 to i32
    %c0_i32_9 = arith.constant 0 : i32
    %11 = arith.cmpi ne, %10, %c0_i32_9 : i32
    scf.if %11 {
      %c0_10 = arith.constant 0 : index
      %c0_11 = arith.constant 0 : index
      %12 = vector.load %arg8[%c0_10, %c0_11] : memref<16x1024xf32, #tpu.memory_space<vmem>>, vector<16x1024xf32>
      %c0_12 = arith.constant 0 : index
      %c0_13 = arith.constant 0 : index
      %13 = vector.load %arg4[%c0_12, %c0_13] : memref<1x1024xf32, #tpu.memory_space<vmem>>, vector<1x1024xf32>
      %14 = vector.broadcast %13 : vector<1x1024xf32> to vector<16x1024xf32>
      %15 = arith.addf %12, %14 : vector<16x1024xf32>
      %cst_14 = arith.constant 0.000000e+00 : f32
      %16 = vector.broadcast %cst_14 : f32 to vector<16x1024xf32>
      %17 = arith.maximumf %15, %16 : vector<16x1024xf32>
      %18 = arith.truncf %17 : vector<16x1024xf32> to vector<16x1024xbf16>
      %c0_15 = arith.constant 0 : index
      %c0_16 = arith.constant 0 : index
      %19 = vector.load %arg5[%c0_15, %c0_16] : memref<1024x128xbf16, #tpu.memory_space<vmem>>, vector<1024x128xbf16>
      %cst_17 = arith.constant dense<0.000000e+00> : vector<16x128xf32>
      %20 = tpu.matmul %18, %19, %cst_17 {dimension_numbers = #tpu.dot_dimension_numbers<[1], [0], [0], [1], [0, 0, 1, 1], [], []>} : vector<16x1024xbf16>, vector<1024x128xbf16>, vector<16x128xf32> -> vector<16x128xf32>
      %c0_18 = arith.constant 0 : index
      %c0_19 = arith.constant 0 : index
      %21 = vector.load %arg6[%c0_18, %c0_19] : memref<1x128xf32, #tpu.memory_space<vmem>>, vector<1x128xf32>
      %22 = vector.broadcast %21 : vector<1x128xf32> to vector<16x128xf32>
      %23 = arith.addf %20, %22 : vector<16x128xf32>
      %c0_20 = arith.constant 0 : index
      %c0_21 = arith.constant 0 : index
      %24 = vector.load %arg7[%c0_20, %c0_21] : memref<16x128xf32, #tpu.memory_space<vmem>>, vector<16x128xf32>
      tpu.vector_store %arg7[%c0_20, %c0_21], %23 {strides = array<i32>} : memref<16x128xf32, #tpu.memory_space<vmem>>, vector<16x128xf32>,
    } else {
    }
    return
  }
  func.func @transform_0(%arg0: i32, %arg1: i32) -> (i32, i32) {
    %c0_i32 = arith.constant 0 : i32
    return %arg0, %arg1 : i32, i32
  }
  func.func @transform_1(%arg0: i32, %arg1: i32) -> (i32, i32) {
    %c0_i32 = arith.constant 0 : i32
    %c0_i32_0 = arith.constant 0 : i32
    return %arg1, %c0_i32 : i32, i32
  }
  func.func @transform_2(%arg0: i32, %arg1: i32) -> (i32, i32) {
    %c0_i32 = arith.constant 0 : i32
    %c0_i32_0 = arith.constant 0 : i32
    %c0_i32_1 = arith.constant 0 : i32
    return %c0_i32, %c0_i32_0 : i32, i32
  }
  func.func @transform_3(%arg0: i32, %arg1: i32) -> (i32, i32) {
    %c0_i32 = arith.constant 0 : i32
    %c0_i32_0 = arith.constant 0 : i32
    %c0_i32_1 = arith.constant 0 : i32
    return %c0_i32, %c0_i32_0 : i32, i32
  }
  func.func @transform_4(%arg0: i32, %arg1: i32) -> (i32, i32) {
    %c0_i32 = arith.constant 0 : i32
    %c0_i32_0 = arith.constant 0 : i32
    %c0_i32_1 = arith.constant 0 : i32
    return %c0_i32, %c0_i32_0 : i32, i32
  }
  func.func @transform_5(%arg0: i32, %arg1: i32) -> (i32, i32) {
    %c0_i32 = arith.constant 0 : i32
    %c0_i32_0 = arith.constant 0 : i32
    return %arg0, %c0_i32 : i32, i32
  }
}

</mosaic_0001>

<llo_original>
// kernel: tpu_custom_call.1
$region0: #{tpu_custom_call.1}
  #allocation0 [shape = 'u32[]', space=smem, size = 0x4, offset = 0x4, fixed_abs, tag = 'smem constant byte address 0x4 - core index']
  #allocation1 [shape = 'u32[144,128]{1,0:T(1,128)}', space=vmem, size = 0x12000, scoped, tag = 'internal scratch']
  #allocation2 [shape = 'f32[16,1024]{1,0:T(8,128)}', space=vmem, size = 0x10000, scoped, tag = 'scratch operand']
  %s0 = inlined_call_operand.hbm [shape: bf16[16,256], index: 0, kind: input, shape index: {}]
  %s1 = inlined_call_operand.hbm [shape: bf16[256,1024], index: 1, kind: input, shape index: {}]
  %s2 = inlined_call_operand.hbm [shape: f32[1,1024], index: 2, kind: input, shape index: {}]
  %s3 = inlined_call_operand.hbm [shape: bf16[1024,128], index: 3, kind: input, shape index: {}]
  %s4 = inlined_call_operand.vmem [shape: f32[1,128], index: 4, kind: input, shape index: {}]
  %s5 = inlined_call_operand.hbm [shape: f32[16,128], index: 5, kind: output, shape index: {}]
  %s6 = sld [smem:[#allocation0]]
  $region54: #{tpu_custom_call.1} parent=0
    _
  %s8 = ssub.s32 1, %s6
  %s9 = scalar_select 0, %s8, %s6
  $region1: #{tpu_custom_call.1} parent=0
    #allocation3 [shape = 'u8[8192]{0}', space=vmem, size = 0x2000, scoped, tag = 'input window, operand 0, single buffered']
    #allocation4 [shape = 's32[1]{0}', space=sflag, size = 0x4, scoped, tag = 'scoped memory for tpu_custom_call.1']
    #allocation5 [shape = 's32[1]{0}', space=sflag, size = 0x4, scoped, tag = 'scoped memory for tpu_custom_call.1']
    #allocation6 [shape = 'u8[524288]{0}', space=vmem, size = 0x80000, scoped, tag = 'input window, operand 1, single buffered']
    #allocation7 [shape = 's32[1]{0}', space=sflag, size = 0x4, scoped, tag = 'scoped memory for tpu_custom_call.1']
    #allocation8 [shape = 'u8[4096]{0}', space=vmem, size = 0x1000, scoped, tag = 'input window, operand 2, single buffered']
    #allocation9 [shape = 'u8[262144]{0}', space=vmem, size = 0x40000, scoped, tag = 'input window, operand 3, single buffered']
    #allocation10 [shape = 's32[1]{0}', space=sflag, size = 0x4, scoped, tag = 'scoped memory for tpu_custom_call.1']
    #allocation11 [shape = 'u8[8192]{0}', space=vmem, size = 0x2000, scoped, tag = 'output window, operand 0, single buffered']
    %10 = vsyncpa [#allocation4], 0
    %11 = vsyncpa [#allocation7], 0
    %12 = vsyncpa [#allocation10], 0
    %13 = vsyncpa [#allocation5], 0
    // Predicated region
    $region2: #{tpu_custom_call.1} parent=1 // pred_check
      _
    $region3: #{tpu_custom_call.1} parent=1 // pred_check_branch
      %15 = sbr.rel (0) target = $region5
    $region4: #{tpu_custom_call.1} parent=1 // pred_region
      %s17 = ssub.s32 256, 256
      %18 = vsyncadd [#allocation4], %s17
      %s19 = sshll.u32 [#allocation3], 4
      %s20 = int_to_ptr.vmem [resolvable:$true] %s19
      %25 = dma.hbm_to_vmem [thread:$0]  %s0, 256, %s20, [#allocation4], 128, 128, 8
    $region5: #{tpu_custom_call.1} parent=1 // pred_fallthru
      _
    // Predicated region
    $region6: #{tpu_custom_call.1} parent=1 // pred_check
      _
    $region7: #{tpu_custom_call.1} parent=1 // pred_check_branch
      %27 = sbr.rel (0) target = $region9
    $region8: #{tpu_custom_call.1} parent=1 // pred_region
      %s29 = ssub.s32 16384, 16384
      %30 = vsyncadd [#allocation7], %s29
      %s31 = sshll.u32 [#allocation6], 4
      %s32 = int_to_ptr.vmem [resolvable:$true] %s31
      %37 = dma.hbm_to_vmem [thread:$0]  %s1, 16384, %s32, [#allocation7], 512, 512, 32
    $region9: #{tpu_custom_call.1} parent=1 // pred_fallthru
      _
    // Predicated region
    $region10: #{tpu_custom_call.1} parent=1 // pred_check
      _
    $region11: #{tpu_custom_call.1} parent=1 // pred_check_branch
      %39 = sbr.rel (0) target = $region13
    $region12: #{tpu_custom_call.1} parent=1 // pred_region
      %s41 = ssub.s32 128, 128
      %42 = vsyncadd [#allocation7], %s41
      %s44 = sshll.u32 [#allocation8], 4
      %s45 = int_to_ptr.vmem [resolvable:$true] %s44
      %47 = dma.hbm_to_vmem [thread:$0]  %s2, 128, %s45, [#allocation7]
    $region13: #{tpu_custom_call.1} parent=1 // pred_fallthru
      _
    // Predicated region
    $region14: #{tpu_custom_call.1} parent=1 // pred_check
      _
    $region15: #{tpu_custom_call.1} parent=1 // pred_check_branch
      %49 = sbr.rel (0) target = $region17
    $region16: #{tpu_custom_call.1} parent=1 // pred_region
      %s51 = ssub.s32 8192, 8192
      %52 = vsyncadd [#allocation10], %s51
      %s53 = sshll.u32 [#allocation9], 4
      %s54 = int_to_ptr.vmem [resolvable:$true] %s53
      %59 = dma.hbm_to_vmem [thread:$0]  %s3, 8192, %s54, [#allocation10], 64, 64, 4
    $region17: #{tpu_custom_call.1} parent=1 // pred_fallthru
      _
    // Predicated region
    $region18: #{tpu_custom_call.1} parent=1 // pred_check
      _
    $region19: #{tpu_custom_call.1} parent=1 // pred_check_branch
      %61 = sbr.rel (0) target = $region21
    $region20: #{tpu_custom_call.1} parent=1 // pred_region
      _
    $region21: #{tpu_custom_call.1} parent=1 // pred_fallthru
      _
    // Predicated region
    $region22: #{tpu_custom_call.1} parent=1 // pred_check
      _
    $region23: #{tpu_custom_call.1} parent=1 // pred_check_branch
      %63 = sbr.rel (0) target = $region25
    $region24: #{tpu_custom_call.1} parent=1 // pred_region
      %64 = dma.done [#allocation4], 256
    $region25: #{tpu_custom_call.1} parent=1 // pred_fallthru
      _
    // Predicated region
    $region26: #{tpu_custom_call.1} parent=1 // pred_check
      _
    $region27: #{tpu_custom_call.1} parent=1 // pred_check_branch
      %66 = sbr.rel (0) target = $region29
    $region28: #{tpu_custom_call.1} parent=1 // pred_region
      %67 = dma.done [#allocation7], 16384
    $region29: #{tpu_custom_call.1} parent=1 // pred_fallthru
      _
    // Predicated region
    $region30: #{tpu_custom_call.1} parent=1 // pred_check
      _
    $region31: #{tpu_custom_call.1} parent=1 // pred_check_branch
      %69 = sbr.rel (0) target = $region33
    $region32: #{tpu_custom_call.1} parent=1 // pred_region
      %70 = dma.done [#allocation7], 128
    $region33: #{tpu_custom_call.1} parent=1 // pred_fallthru
      _
    // Predicated region
    $region34: #{tpu_custom_call.1} parent=1 // pred_check
      _
    $region35: #{tpu_custom_call.1} parent=1 // pred_check_branch
      %72 = sbr.rel (0) target = $region37
    $region36: #{tpu_custom_call.1} parent=1 // pred_region
      %73 = dma.done [#allocation10], 8192
    $region37: #{tpu_custom_call.1} parent=1 // pred_fallthru
      _
    %p75 = scmp.eq.s32.totalorder 0, 0
    // Predicated region
    $region38: #{tpu_custom_call.1} parent=1 // pred_check
      %p76 = pneg %p75
    $region39: #{tpu_custom_call.1} parent=1 // pred_check_branch
      %78 = sbr.rel (%p76) target = $region41
    $region40: #{tpu_custom_call.1} parent=1 // pred_region
      %79 = vst [vmem:[#allocation2] sm:$0xff] 0.0
      %80 = vst [vmem:[#allocation2 + $0x8] sm:$0xff] 0.0
      %81 = vst [vmem:[#allocation2 + $0x10] sm:$0xff] 0.0
      %82 = vst [vmem:[#allocation2 + $0x18] sm:$0xff] 0.0
      %83 = vst [vmem:[#allocation2 + $0x20] sm:$0xff] 0.0
      %84 = vst [vmem:[#allocation2 + $0x28] sm:$0xff] 0.0
      %85 = vst [vmem:[#allocation2 + $0x30] sm:$0xff] 0.0
      %86 = vst [vmem:[#allocation2 + $0x38] sm:$0xff] 0.0
      %87 = vst [vmem:[#allocation2 + $0x40] sm:$0xff] 0.0
      %88 = vst [vmem:[#allocation2 + $0x48] sm:$0xff] 0.0
      %89 = vst [vmem:[#allocation2 + $0x50] sm:$0xff] 0.0
      %90 = vst [vmem:[#allocation2 + $0x58] sm:$0xff] 0.0
      %91 = vst [vmem:[#allocation2 + $0x60] sm:$0xff] 0.0
      %92 = vst [vmem:[#allocation2 + $0x68] sm:$0xff] 0.0
      %93 = vst [vmem:[#allocation2 + $0x70] sm:$0xff] 0.0
      %94 = vst [vmem:[#allocation2 + $0x78] sm:$0xff] 0.0
    $region41: #{tpu_custom_call.1} parent=1 // pred_fallthru
      _
    %v95 = vld [vmem:[#allocation2] sm:$0xff]
    %v96 = vld [vmem:[#allocation2 + $0x8] sm:$0xff]
    %v97 = vld [vmem:[#allocation2 + $0x10] sm:$0xff]
    %v98 = vld [vmem:[#allocation2 + $0x18] sm:$0xff]
    %v99 = vld [vmem:[#allocation2 + $0x20] sm:$0xff]
    %v100 = vld [vmem:[#allocation2 + $0x28] sm:$0xff]
    %v101 = vld [vmem:[#allocation2 + $0x30] sm:$0xff]
    %v102 = vld [vmem:[#allocation2 + $0x38] sm:$0xff]
    %v103 = vld [vmem:[#allocation2 + $0x40] sm:$0xff]
    %v104 = vld [vmem:[#allocation2 + $0x48] sm:$0xff]
    %v105 = vld [vmem:[#allocation2 + $0x50] sm:$0xff]
    %v106 = vld [vmem:[#allocation2 + $0x58] sm:$0xff]
    %v107 = vld [vmem:[#allocation2 + $0x60] sm:$0xff]
    %v108 = vld [vmem:[#allocation2 + $0x68] sm:$0xff]
    %v109 = vld [vmem:[#allocation2 + $0x70] sm:$0xff]
    %v110 = vld [vmem:[#allocation2 + $0x78] sm:$0xff]
    %v111 = vld [vmem:[#allocation3] sm:$0xff]
    %v112 = vld [vmem:[#allocation3 + $0x8] sm:$0xff]
    %v113 = vld [vmem:[#allocation6] sm:$0xff]
    %v114 = vld [vmem:[#allocation6 + $0x8] sm:$0xff]
    %v115 = vld [vmem:[#allocation6 + $0x10] sm:$0xff]
    %v116 = vld [vmem:[#allocation6 + $0x18] sm:$0xff]
    %v117 = vld [vmem:[#allocation6 + $0x20] sm:$0xff]
    %v118 = vld [vmem:[#allocation6 + $0x28] sm:$0xff]
    %v119 = vld [vmem:[#allocation6 + $0x30] sm:$0xff]
    %v120 = vld [vmem:[#allocation6 + $0x38] sm:$0xff]
    %v121 = vld [vmem:[#allocation6 + $0x40] sm:$0xff]
    %v122 = vld [vmem:[#allocation6 + $0x48] sm:$0xff]
    %v123 = vld [vmem:[#allocation6 + $0x50] sm:$0xff]
    %v124 = vld [vmem:[#allocation6 + $0x58] sm:$0xff]
    %v125 = vld [vmem:[#allocation6 + $0x60] sm:$0xff]
    %v126 = vld [vmem:[#allocation6 + $0x68] sm:$0xff]
    %v127 = vld [vmem:[#allocation6 + $0x70] sm:$0xff]
    %v128 = vld [vmem:[#allocation6 + $0x78] sm:$0xff]
    %v129 = vld [vmem:[#allocation6 + $0x80] sm:$0xff]
    %v130 = vld [vmem:[#allocation6 + $0x88] sm:$0xff]
    %v131 = vld [vmem:[#allocation6 + $0x90] sm:$0xff]
    %v132 = vld [vmem:[#allocation6 + $0x98] sm:$0xff]
    %v133 = vld [vmem:[#allocation6 + $0xa0] sm:$0xff]
    %v134 = vld [vmem:[#allocation6 + $0xa8] sm:$0xff]
    %v135 = vld [vmem:[#allocation6 + $0xb0] sm:$0xff]
    %v136 = vld [vmem:[#allocation6 + $0xb8] sm:$0xff]
    %v137 = vld [vmem:[#allocation6 + $0xc0] sm:$0xff]
    %v138 = vld [vmem:[#allocation6 + $0xc8] sm:$0xff]
    %v139 = vld [vmem:[#allocation6 + $0xd0] sm:$0xff]
    %v140 = vld [vmem:[#allocation6 + $0xd8] sm:$0xff]
    %v141 = vld [vmem:[#allocation6 + $0xe0] sm:$0xff]
    %v142 = vld [vmem:[#allocation6 + $0xe8] sm:$0xff]
    %v143 = vld [vmem:[#allocation6 + $0xf0] sm:$0xff]
    %v144 = vld [vmem:[#allocation6 + $0xf8] sm:$0xff]
    %v145 = vld [vmem:[#allocation6 + $0x100] sm:$0xff]
    %v146 = vld [vmem:[#allocation6 + $0x108] sm:$0xff]
    %v147 = vld [vmem:[#allocation6 + $0x110] sm:$0xff]
    %v148 = vld [vmem:[#allocation6 + $0x118] sm:$0xff]
    %v149 = vld [vmem:[#allocation6 + $0x120] sm:$0xff]
    %v150 = vld [vmem:[#allocation6 + $0x128] sm:$0xff]
    %v151 = vld [vmem:[#allocation6 + $0x130] sm:$0xff]
    %v152 = vld [vmem:[#allocation6 + $0x138] sm:$0xff]
    %v153 = vld [vmem:[#allocation6 + $0x140] sm:$0xff]
    %v154 = vld [vmem:[#allocation6 + $0x148] sm:$0xff]
    %v155 = vld [vmem:[#allocation6 + $0x150] sm:$0xff]
    %v156 = vld [vmem:[#allocation6 + $0x158] sm:$0xff]
    %v157 = vld [vmem:[#allocation6 + $0x160] sm:$0xff]
    %v158 = vld [vmem:[#allocation6 + $0x168] sm:$0xff]
    %v159 = vld [vmem:[#allocation6 + $0x170] sm:$0xff]
    %v160 = vld [vmem:[#allocation6 + $0x178] sm:$0xff]
    %v161 = vld [vmem:[#allocation6 + $0x180] sm:$0xff]
    %v162 = vld [vmem:[#allocation6 + $0x188] sm:$0xff]
    %v163 = vld [vmem:[#allocation6 + $0x190] sm:$0xff]
    %v164 = vld [vmem:[#allocation6 + $0x198] sm:$0xff]
    %v165 = vld [vmem:[#allocation6 + $0x1a0] sm:$0xff]
    %v166 = vld [vmem:[#allocation6 + $0x1a8] sm:$0xff]
    %v167 = vld [vmem:[#allocation6 + $0x1b0] sm:$0xff]
    %v168 = vld [vmem:[#allocation6 + $0x1b8] sm:$0xff]
    %v169 = vld [vmem:[#allocation6 + $0x1c0] sm:$0xff]
    %v170 = vld [vmem:[#allocation6 + $0x1c8] sm:$0xff]
    %v171 = vld [vmem:[#allocation6 + $0x1d0] sm:$0xff]
    %v172 = vld [vmem:[#allocation6 + $0x1d8] sm:$0xff]
    %v173 = vld [vmem:[#allocation6 + $0x1e0] sm:$0xff]
    %v174 = vld [vmem:[#allocation6 + $0x1e8] sm:$0xff]
    %v175 = vld [vmem:[#allocation6 + $0x1f0] sm:$0xff]
    %v176 = vld [vmem:[#allocation6 + $0x1f8] sm:$0xff]
    %v177 = vld [vmem:[#allocation6 + $0x200] sm:$0xff]
    %v178 = vld [vmem:[#allocation6 + $0x208] sm:$0xff]
    %v179 = vld [vmem:[#allocation6 + $0x210] sm:$0xff]
    %v180 = vld [vmem:[#allocation6 + $0x218] sm:$0xff]
    %v181 = vld [vmem:[#allocation6 + $0x220] sm:$0xff]
    %v182 = vld [vmem:[#allocation6 + $0x228] sm:$0xff]
    %v183 = vld [vmem:[#allocation6 + $0x230] sm:$0xff]
    %v184 = vld [vmem:[#allocation6 + $0x238] sm:$0xff]
    %v185 = vld [vmem:[#allocation6 + $0x240] sm:$0xff]
    %v186 = vld [vmem:[#allocation6 + $0x248] sm:$0xff]
    %v187 = vld [vmem:[#allocation6 + $0x250] sm:$0xff]
    %v188 = vld [vmem:[#allocation6 + $0x258] sm:$0xff]
    %v189 = vld [vmem:[#allocation6 + $0x260] sm:$0xff]
    %v190 = vld [vmem:[#allocation6 + $0x268] sm:$0xff]
    %v191 = vld [vmem:[#allocation6 + $0x270] sm:$0xff]
    %v192 = vld [vmem:[#allocation6 + $0x278] sm:$0xff]
    %v193 = vld [vmem:[#allocation6 + $0x280] sm:$0xff]
    %v194 = vld [vmem:[#allocation6 + $0x288] sm:$0xff]
    %v195 = vld [vmem:[#allocation6 + $0x290] sm:$0xff]
    %v196 = vld [vmem:[#allocation6 + $0x298] sm:$0xff]
    %v197 = vld [vmem:[#allocation6 + $0x2a0] sm:$0xff]
    %v198 = vld [vmem:[#allocation6 + $0x2a8] sm:$0xff]
    %v199 = vld [vmem:[#allocation6 + $0x2b0] sm:$0xff]
    %v200 = vld [vmem:[#allocation6 + $0x2b8] sm:$0xff]
    %v201 = vld [vmem:[#allocation6 + $0x2c0] sm:$0xff]
    %v202 = vld [vmem:[#allocation6 + $0x2c8] sm:$0xff]
    %v203 = vld [vmem:[#allocation6 + $0x2d0] sm:$0xff]
    %v204 = vld [vmem:[#allocation6 + $0x2d8] sm:$0xff]
    %v205 = vld [vmem:[#allocation6 + $0x2e0] sm:$0xff]
    %v206 = vld [vmem:[#allocation6 + $0x2e8] sm:$0xff]
    %v207 = vld [vmem:[#allocation6 + $0x2f0] sm:$0xff]
    %v208 = vld [vmem:[#allocation6 + $0x2f8] sm:$0xff]
    %v209 = vld [vmem:[#allocation6 + $0x300] sm:$0xff]
    %v210 = vld [vmem:[#allocation6 + $0x308] sm:$0xff]
    %v211 = vld [vmem:[#allocation6 + $0x310] sm:$0xff]
    %v212 = vld [vmem:[#allocation6 + $0x318] sm:$0xff]
    %v213 = vld [vmem:[#allocation6 + $0x320] sm:$0xff]
    %v214 = vld [vmem:[#allocation6 + $0x328] sm:$0xff]
    %v215 = vld [vmem:[#allocation6 + $0x330] sm:$0xff]
    %v216 = vld [vmem:[#allocation6 + $0x338] sm:$0xff]
    %v217 = vld [vmem:[#allocation6 + $0x340] sm:$0xff]
    %v218 = vld [vmem:[#allocation6 + $0x348] sm:$0xff]
    %v219 = vld [vmem:[#allocation6 + $0x350] sm:$0xff]
    %v220 = vld [vmem:[#allocation6 + $0x358] sm:$0xff]
    %v221 = vld [vmem:[#allocation6 + $0x360] sm:$0xff]
    %v222 = vld [vmem:[#allocation6 + $0x368] sm:$0xff]
    %v223 = vld [vmem:[#allocation6 + $0x370] sm:$0xff]
    %v224 = vld [vmem:[#allocation6 + $0x378] sm:$0xff]
    %v225 = vld [vmem:[#allocation6 + $0x380] sm:$0xff]
    %v226 = vld [vmem:[#allocation6 + $0x388] sm:$0xff]
    %v227 = vld [vmem:[#allocation6 + $0x390] sm:$0xff]
    %v228 = vld [vmem:[#allocation6 + $0x398] sm:$0xff]
    %v229 = vld [vmem:[#allocation6 + $0x3a0] sm:$0xff]
    %v230 = vld [vmem:[#allocation6 + $0x3a8] sm:$0xff]
    %v231 = vld [vmem:[#allocation6 + $0x3b0] sm:$0xff]
    %v232 = vld [vmem:[#allocation6 + $0x3b8] sm:$0xff]
    %v233 = vld [vmem:[#allocation6 + $0x3c0] sm:$0xff]
    %v234 = vld [vmem:[#allocation6 + $0x3c8] sm:$0xff]
    %v235 = vld [vmem:[#allocation6 + $0x3d0] sm:$0xff]
    %v236 = vld [vmem:[#allocation6 + $0x3d8] sm:$0xff]
    %v237 = vld [vmem:[#allocation6 + $0x3e0] sm:$0xff]
    %v238 = vld [vmem:[#allocation6 + $0x3e8] sm:$0xff]
    %v239 = vld [vmem:[#allocation6 + $0x3f0] sm:$0xff]
    %v240 = vld [vmem:[#allocation6 + $0x3f8] sm:$0xff]
    %v243 = vunpack.c.l.b16 %v111
    %v244 = vunpack.c.h.b16 %v111
    %v245 = vunpack.c.l.b16 %v112
    %v246 = vunpack.c.h.b16 %v112
    %v247 = vpack.c.b16 %v245, %v243
    %v248 = vpack.c.b16 %v246, %v244
    %v379 = vunpack.c.l.b16 %v113
    %v380 = vunpack.c.h.b16 %v113
    %v381 = vunpack.c.l.b16 %v114
    %v382 = vunpack.c.h.b16 %v114
    %v383 = vunpack.c.l.b16 %v115
    %v384 = vunpack.c.h.b16 %v115
    %v385 = vunpack.c.l.b16 %v116
    %v386 = vunpack.c.h.b16 %v116
    %v387 = vunpack.c.l.b16 %v117
    %v388 = vunpack.c.h.b16 %v117
    %v389 = vunpack.c.l.b16 %v118
    %v390 = vunpack.c.h.b16 %v118
    %v391 = vunpack.c.l.b16 %v119
    %v392 = vunpack.c.h.b16 %v119
    %v393 = vunpack.c.l.b16 %v120
    %v394 = vunpack.c.h.b16 %v120
    %v395 = vunpack.c.l.b16 %v121
    %v396 = vunpack.c.h.b16 %v121
    %v397 = vunpack.c.l.b16 %v122
    %v398 = vunpack.c.h.b16 %v122
    %v399 = vunpack.c.l.b16 %v123
    %v400 = vunpack.c.h.b16 %v123
    %v401 = vunpack.c.l.b16 %v124
    %v402 = vunpack.c.h.b16 %v124
    %v403 = vunpack.c.l.b16 %v125
    %v404 = vunpack.c.h.b16 %v125
    %v405 = vunpack.c.l.b16 %v126
    %v406 = vunpack.c.h.b16 %v126
    %v407 = vunpack.c.l.b16 %v127
    %v408 = vunpack.c.h.b16 %v127
    %v409 = vunpack.c.l.b16 %v128
    %v410 = vunpack.c.h.b16 %v128
    %v411 = vunpack.c.l.b16 %v129
    %v412 = vunpack.c.h.b16 %v129
    %v413 = vunpack.c.l.b16 %v130
    %v414 = vunpack.c.h.b16 %v130
    %v415 = vunpack.c.l.b16 %v131
    %v416 = vunpack.c.h.b16 %v131
    %v417 = vunpack.c.l.b16 %v132
    %v418 = vunpack.c.h.b16 %v132
    %v419 = vunpack.c.l.b16 %v133
    %v420 = vunpack.c.h.b16 %v133
    %v421 = vunpack.c.l.b16 %v134
    %v422 = vunpack.c.h.b16 %v134
    %v423 = vunpack.c.l.b16 %v135
    %v424 = vunpack.c.h.b16 %v135
    %v425 = vunpack.c.l.b16 %v136
    %v426 = vunpack.c.h.b16 %v136
    %v427 = vunpack.c.l.b16 %v137
    %v428 = vunpack.c.h.b16 %v137
    %v429 = vunpack.c.l.b16 %v138
    %v430 = vunpack.c.h.b16 %v138
    %v431 = vunpack.c.l.b16 %v139
    %v432 = vunpack.c.h.b16 %v139
    %v433 = vunpack.c.l.b16 %v140
    %v434 = vunpack.c.h.b16 %v140
    %v435 = vunpack.c.l.b16 %v141
    %v436 = vunpack.c.h.b16 %v141
    %v437 = vunpack.c.l.b16 %v142
    %v438 = vunpack.c.h.b16 %v142
    %v439 = vunpack.c.l.b16 %v143
    %v440 = vunpack.c.h.b16 %v143
    %v441 = vunpack.c.l.b16 %v144
    %v442 = vunpack.c.h.b16 %v144
    %v443 = vunpack.c.l.b16 %v145
    %v444 = vunpack.c.h.b16 %v145
    %v445 = vunpack.c.l.b16 %v146
    %v446 = vunpack.c.h.b16 %v146
    %v447 = vunpack.c.l.b16 %v147
    %v448 = vunpack.c.h.b16 %v147
    %v449 = vunpack.c.l.b16 %v148
    %v450 = vunpack.c.h.b16 %v148
    %v451 = vunpack.c.l.b16 %v149
    %v452 = vunpack.c.h.b16 %v149
    %v453 = vunpack.c.l.b16 %v150
    %v454 = vunpack.c.h.b16 %v150
    %v455 = vunpack.c.l.b16 %v151
    %v456 = vunpack.c.h.b16 %v151
    %v457 = vunpack.c.l.b16 %v152
    %v458 = vunpack.c.h.b16 %v152
    %v459 = vunpack.c.l.b16 %v153
    %v460 = vunpack.c.h.b16 %v153
    %v461 = vunpack.c.l.b16 %v154
    %v462 = vunpack.c.h.b16 %v154
    %v463 = vunpack.c.l.b16 %v155
    %v464 = vunpack.c.h.b16 %v155
    %v465 = vunpack.c.l.b16 %v156
    %v466 = vunpack.c.h.b16 %v156
    %v467 = vunpack.c.l.b16 %v157
    %v468 = vunpack.c.h.b16 %v157
    %v469 = vunpack.c.l.b16 %v158
    %v470 = vunpack.c.h.b16 %v158
    %v471 = vunpack.c.l.b16 %v159
    %v472 = vunpack.c.h.b16 %v159
    %v473 = vunpack.c.l.b16 %v160
    %v474 = vunpack.c.h.b16 %v160
    %v475 = vunpack.c.l.b16 %v161
    %v476 = vunpack.c.h.b16 %v161
    %v477 = vunpack.c.l.b16 %v162
    %v478 = vunpack.c.h.b16 %v162
    %v479 = vunpack.c.l.b16 %v163
    %v480 = vunpack.c.h.b16 %v163
    %v481 = vunpack.c.l.b16 %v164
    %v482 = vunpack.c.h.b16 %v164
    %v483 = vunpack.c.l.b16 %v165
    %v484 = vunpack.c.h.b16 %v165
    %v485 = vunpack.c.l.b16 %v166
    %v486 = vunpack.c.h.b16 %v166
    %v487 = vunpack.c.l.b16 %v167
    %v488 = vunpack.c.h.b16 %v167
    %v489 = vunpack.c.l.b16 %v168
    %v490 = vunpack.c.h.b16 %v168
    %v491 = vunpack.c.l.b16 %v169
    %v492 = vunpack.c.h.b16 %v169
    %v493 = vunpack.c.l.b16 %v170
    %v494 = vunpack.c.h.b16 %v170
    %v495 = vunpack.c.l.b16 %v171
    %v496 = vunpack.c.h.b16 %v171
    %v497 = vunpack.c.l.b16 %v172
    %v498 = vunpack.c.h.b16 %v172
    %v499 = vunpack.c.l.b16 %v173
    %v500 = vunpack.c.h.b16 %v173
    %v501 = vunpack.c.l.b16 %v174
    %v502 = vunpack.c.h.b16 %v174
    %v503 = vunpack.c.l.b16 %v175
    %v504 = vunpack.c.h.b16 %v175
    %v505 = vunpack.c.l.b16 %v176
    %v506 = vunpack.c.h.b16 %v176
    %v507 = vunpack.c.l.b16 %v177
    %v508 = vunpack.c.h.b16 %v177
    %v509 = vunpack.c.l.b16 %v178
    %v510 = vunpack.c.h.b16 %v178
    %v511 = vunpack.c.l.b16 %v179
    %v512 = vunpack.c.h.b16 %v179
    %v513 = vunpack.c.l.b16 %v180
    %v514 = vunpack.c.h.b16 %v180
    %v515 = vunpack.c.l.b16 %v181
    %v516 = vunpack.c.h.b16 %v181
    %v517 = vunpack.c.l.b16 %v182
    %v518 = vunpack.c.h.b16 %v182
    %v519 = vunpack.c.l.b16 %v183
    %v520 = vunpack.c.h.b16 %v183
    %v521 = vunpack.c.l.b16 %v184
    %v522 = vunpack.c.h.b16 %v184
    %v523 = vunpack.c.l.b16 %v185
    %v524 = vunpack.c.h.b16 %v185
    %v525 = vunpack.c.l.b16 %v186
    %v526 = vunpack.c.h.b16 %v186
    %v527 = vunpack.c.l.b16 %v187
    %v528 = vunpack.c.h.b16 %v187
    %v529 = vunpack.c.l.b16 %v188
    %v530 = vunpack.c.h.b16 %v188
    %v531 = vunpack.c.l.b16 %v189
    %v532 = vunpack.c.h.b16 %v189
    %v533 = vunpack.c.l.b16 %v190
    %v534 = vunpack.c.h.b16 %v190
    %v535 = vunpack.c.l.b16 %v191
    %v536 = vunpack.c.h.b16 %v191
    %v537 = vunpack.c.l.b16 %v192
    %v538 = vunpack.c.h.b16 %v192
    %v539 = vunpack.c.l.b16 %v193
    %v540 = vunpack.c.h.b16 %v193
    %v541 = vunpack.c.l.b16 %v194
    %v542 = vunpack.c.h.b16 %v194
    %v543 = vunpack.c.l.b16 %v195
    %v544 = vunpack.c.h.b16 %v195
    %v545 = vunpack.c.l.b16 %v196
    %v546 = vunpack.c.h.b16 %v196
    %v547 = vunpack.c.l.b16 %v197
    %v548 = vunpack.c.h.b16 %v197
    %v549 = vunpack.c.l.b16 %v198
    %v550 = vunpack.c.h.b16 %v198
    %v551 = vunpack.c.l.b16 %v199
    %v552 = vunpack.c.h.b16 %v199
    %v553 = vunpack.c.l.b16 %v200
    %v554 = vunpack.c.h.b16 %v200
    %v555 = vunpack.c.l.b16 %v201
    %v556 = vunpack.c.h.b16 %v201
    %v557 = vunpack.c.l.b16 %v202
    %v558 = vunpack.c.h.b16 %v202
    %v559 = vunpack.c.l.b16 %v203
    %v560 = vunpack.c.h.b16 %v203
    %v561 = vunpack.c.l.b16 %v204
    %v562 = vunpack.c.h.b16 %v204
    %v563 = vunpack.c.l.b16 %v205
    %v564 = vunpack.c.h.b16 %v205
    %v565 = vunpack.c.l.b16 %v206
    %v566 = vunpack.c.h.b16 %v206
    %v567 = vunpack.c.l.b16 %v207
    %v568 = vunpack.c.h.b16 %v207
    %v569 = vunpack.c.l.b16 %v208
    %v570 = vunpack.c.h.b16 %v208
    %v571 = vunpack.c.l.b16 %v209
    %v572 = vunpack.c.h.b16 %v209
    %v573 = vunpack.c.l.b16 %v210
    %v574 = vunpack.c.h.b16 %v210
    %v575 = vunpack.c.l.b16 %v211
    %v576 = vunpack.c.h.b16 %v211
    %v577 = vunpack.c.l.b16 %v212
    %v578 = vunpack.c.h.b16 %v212
    %v579 = vunpack.c.l.b16 %v213
    %v580 = vunpack.c.h.b16 %v213
    %v581 = vunpack.c.l.b16 %v214
    %v582 = vunpack.c.h.b16 %v214
    %v583 = vunpack.c.l.b16 %v215
    %v584 = vunpack.c.h.b16 %v215
    %v585 = vunpack.c.l.b16 %v216
    %v586 = vunpack.c.h.b16 %v216
    %v587 = vunpack.c.l.b16 %v217
    %v588 = vunpack.c.h.b16 %v217
    %v589 = vunpack.c.l.b16 %v218
    %v590 = vunpack.c.h.b16 %v218
    %v591 = vunpack.c.l.b16 %v219
    %v592 = vunpack.c.h.b16 %v219
    %v593 = vunpack.c.l.b16 %v220
    %v594 = vunpack.c.h.b16 %v220
    %v595 = vunpack.c.l.b16 %v221
    %v596 = vunpack.c.h.b16 %v221
    %v597 = vunpack.c.l.b16 %v222
    %v598 = vunpack.c.h.b16 %v222
    %v599 = vunpack.c.l.b16 %v223
    %v600 = vunpack.c.h.b16 %v223
    %v601 = vunpack.c.l.b16 %v224
    %v602 = vunpack.c.h.b16 %v224
    %v603 = vunpack.c.l.b16 %v225
    %v604 = vunpack.c.h.b16 %v225
    %v605 = vunpack.c.l.b16 %v226
    %v606 = vunpack.c.h.b16 %v226
    %v607 = vunpack.c.l.b16 %v227
    %v608 = vunpack.c.h.b16 %v227
    %v609 = vunpack.c.l.b16 %v228
    %v610 = vunpack.c.h.b16 %v228
    %v611 = vunpack.c.l.b16 %v229
    %v612 = vunpack.c.h.b16 %v229
    %v613 = vunpack.c.l.b16 %v230
    %v614 = vunpack.c.h.b16 %v230
    %v615 = vunpack.c.l.b16 %v231
    %v616 = vunpack.c.h.b16 %v231
    %v617 = vunpack.c.l.b16 %v232
    %v618 = vunpack.c.h.b16 %v232
    %v619 = vunpack.c.l.b16 %v233
    %v620 = vunpack.c.h.b16 %v233
    %v621 = vunpack.c.l.b16 %v234
    %v622 = vunpack.c.h.b16 %v234
    %v623 = vunpack.c.l.b16 %v235
    %v624 = vunpack.c.h.b16 %v235
    %v625 = vunpack.c.l.b16 %v236
    %v626 = vunpack.c.h.b16 %v236
    %v627 = vunpack.c.l.b16 %v237
    %v628 = vunpack.c.h.b16 %v237
    %v629 = vunpack.c.l.b16 %v238
    %v630 = vunpack.c.h.b16 %v238
    %v631 = vunpack.c.l.b16 %v239
    %v632 = vunpack.c.h.b16 %v239
    %v633 = vunpack.c.l.b16 %v240
    %v634 = vunpack.c.h.b16 %v240
    %v635 = vpack.c.b16 %v387, %v379
    %v636 = vpack.c.b16 %v388, %v380
    %v637 = vpack.c.b16 %v389, %v381
    %v638 = vpack.c.b16 %v390, %v382
    %v639 = vpack.c.b16 %v391, %v383
    %v640 = vpack.c.b16 %v392, %v384
    %v641 = vpack.c.b16 %v393, %v385
    %v642 = vpack.c.b16 %v394, %v386
    %v643 = vpack.c.b16 %v403, %v395
    %v644 = vpack.c.b16 %v404, %v396
    %v645 = vpack.c.b16 %v405, %v397
    %v646 = vpack.c.b16 %v406, %v398
    %v647 = vpack.c.b16 %v407, %v399
    %v648 = vpack.c.b16 %v408, %v400
    %v649 = vpack.c.b16 %v409, %v401
    %v650 = vpack.c.b16 %v410, %v402
    %v651 = vpack.c.b16 %v419, %v411
    %v652 = vpack.c.b16 %v420, %v412
    %v653 = vpack.c.b16 %v421, %v413
    %v654 = vpack.c.b16 %v422, %v414
    %v655 = vpack.c.b16 %v423, %v415
    %v656 = vpack.c.b16 %v424, %v416
    %v657 = vpack.c.b16 %v425, %v417
    %v658 = vpack.c.b16 %v426, %v418
    %v659 = vpack.c.b16 %v435, %v427
    %v660 = vpack.c.b16 %v436, %v428
    %v661 = vpack.c.b16 %v437, %v429
    %v662 = vpack.c.b16 %v438, %v430
    %v663 = vpack.c.b16 %v439, %v431
    %v664 = vpack.c.b16 %v440, %v432
    %v665 = vpack.c.b16 %v441, %v433
    %v666 = vpack.c.b16 %v442, %v434
    %v667 = vpack.c.b16 %v451, %v443
    %v668 = vpack.c.b16 %v452, %v444
    %v669 = vpack.c.b16 %v453, %v445
    %v670 = vpack.c.b16 %v454, %v446
    %v671 = vpack.c.b16 %v455, %v447
    %v672 = vpack.c.b16 %v456, %v448
    %v673 = vpack.c.b16 %v457, %v449
    %v674 = vpack.c.b16 %v458, %v450
    %v675 = vpack.c.b16 %v467, %v459
    %v676 = vpack.c.b16 %v468, %v460
    %v677 = vpack.c.b16 %v469, %v461
    %v678 = vpack.c.b16 %v470, %v462
    %v679 = vpack.c.b16 %v471, %v463
    %v680 = vpack.c.b16 %v472, %v464
    %v681 = vpack.c.b16 %v473, %v465
    %v682 = vpack.c.b16 %v474, %v466
    %v683 = vpack.c.b16 %v483, %v475
    %v684 = vpack.c.b16 %v484, %v476
    %v685 = vpack.c.b16 %v485, %v477
    %v686 = vpack.c.b16 %v486, %v478
    %v687 = vpack.c.b16 %v487, %v479
    %v688 = vpack.c.b16 %v488, %v480
    %v689 = vpack.c.b16 %v489, %v481
    %v690 = vpack.c.b16 %v490, %v482
    %v691 = vpack.c.b16 %v499, %v491
    %v692 = vpack.c.b16 %v500, %v492
    %v693 = vpack.c.b16 %v501, %v493
    %v694 = vpack.c.b16 %v502, %v494
    %v695 = vpack.c.b16 %v503, %v495
    %v696 = vpack.c.b16 %v504, %v496
    %v697 = vpack.c.b16 %v505, %v497
    %v698 = vpack.c.b16 %v506, %v498
    %v699 = vpack.c.b16 %v515, %v507
    %v700 = vpack.c.b16 %v516, %v508
    %v701 = vpack.c.b16 %v517, %v509
    %v702 = vpack.c.b16 %v518, %v510
    %v703 = vpack.c.b16 %v519, %v511
    %v704 = vpack.c.b16 %v520, %v512
    %v705 = vpack.c.b16 %v521, %v513
    %v706 = vpack.c.b16 %v522, %v514
    %v707 = vpack.c.b16 %v531, %v523
    %v708 = vpack.c.b16 %v532, %v524
    %v709 = vpack.c.b16 %v533, %v525
    %v710 = vpack.c.b16 %v534, %v526
    %v711 = vpack.c.b16 %v535, %v527
    %v712 = vpack.c.b16 %v536, %v528
    %v713 = vpack.c.b16 %v537, %v529
    %v714 = vpack.c.b16 %v538, %v530
    %v715 = vpack.c.b16 %v547, %v539
    %v716 = vpack.c.b16 %v548, %v540
    %v717 = vpack.c.b16 %v549, %v541
    %v718 = vpack.c.b16 %v550, %v542
    %v719 = vpack.c.b16 %v551, %v543
    %v720 = vpack.c.b16 %v552, %v544
    %v721 = vpack.c.b16 %v553, %v545
    %v722 = vpack.c.b16 %v554, %v546
    %v723 = vpack.c.b16 %v563, %v555
    %v724 = vpack.c.b16 %v564, %v556
    %v725 = vpack.c.b16 %v565, %v557
    %v726 = vpack.c.b16 %v566, %v558
    %v727 = vpack.c.b16 %v567, %v559
    %v728 = vpack.c.b16 %v568, %v560
    %v729 = vpack.c.b16 %v569, %v561
    %v730 = vpack.c.b16 %v570, %v562
    %v731 = vpack.c.b16 %v579, %v571
    %v732 = vpack.c.b16 %v580, %v572
    %v733 = vpack.c.b16 %v581, %v573
    %v734 = vpack.c.b16 %v582, %v574
    %v735 = vpack.c.b16 %v583, %v575
    %v736 = vpack.c.b16 %v584, %v576
    %v737 = vpack.c.b16 %v585, %v577
    %v738 = vpack.c.b16 %v586, %v578
    %v739 = vpack.c.b16 %v595, %v587
    %v740 = vpack.c.b16 %v596, %v588
    %v741 = vpack.c.b16 %v597, %v589
    %v742 = vpack.c.b16 %v598, %v590
    %v743 = vpack.c.b16 %v599, %v591
    %v744 = vpack.c.b16 %v600, %v592
    %v745 = vpack.c.b16 %v601, %v593
    %v746 = vpack.c.b16 %v602, %v594
    %v747 = vpack.c.b16 %v611, %v603
    %v748 = vpack.c.b16 %v612, %v604
    %v749 = vpack.c.b16 %v613, %v605
    %v750 = vpack.c.b16 %v614, %v606
    %v751 = vpack.c.b16 %v615, %v607
    %v752 = vpack.c.b16 %v616, %v608
    %v753 = vpack.c.b16 %v617, %v609
    %v754 = vpack.c.b16 %v618, %v610
    %v755 = vpack.c.b16 %v627, %v619
    %v756 = vpack.c.b16 %v628, %v620
    %v757 = vpack.c.b16 %v629, %v621
    %v758 = vpack.c.b16 %v630, %v622
    %v759 = vpack.c.b16 %v631, %v623
    %v760 = vpack.c.b16 %v632, %v624
    %v761 = vpack.c.b16 %v633, %v625
    %v762 = vpack.c.b16 %v634, %v626
    %891 = vmatprep.subr.bf16.mxu0 %v636
    %892 = vmatpush1.bf16.msra.mxu0 %v635
    %893 = vmatprep.subr.bf16.mxu0 %v644
    %894 = vmatpush1.bf16.msra.mxu0 %v643
    %895 = vmatprep.subr.bf16.mxu0 %v652
    %896 = vmatpush1.bf16.msra.mxu0 %v651
    %897 = vmatprep.subr.bf16.mxu0 %v660
    %898 = vmatpush1.bf16.msra.mxu0 %v659
    %899 = vmatprep.subr.bf16.mxu0 %v668
    %900 = vmatpush1.bf16.msra.mxu0 %v667
    %901 = vmatprep.subr.bf16.mxu0 %v676
    %902 = vmatpush1.bf16.msra.mxu0 %v675
    %903 = vmatprep.subr.bf16.mxu0 %v684
    %904 = vmatpush1.bf16.msra.mxu0 %v683
    %905 = vmatprep.subr.bf16.mxu0 %v692
    %906 = vmatpush1.bf16.msra.mxu0 %v691
    %907 = vmatprep.subr.bf16.mxu0 %v700
    %908 = vmatpush1.bf16.msra.mxu0 %v699
    %909 = vmatprep.subr.bf16.mxu0 %v708
    %910 = vmatpush1.bf16.msra.mxu0 %v707
    %911 = vmatprep.subr.bf16.mxu0 %v716
    %912 = vmatpush1.bf16.msra.mxu0 %v715
    %913 = vmatprep.subr.bf16.mxu0 %v724
    %914 = vmatpush1.bf16.msra.mxu0 %v723
    %915 = vmatprep.subr.bf16.mxu0 %v732
    %916 = vmatpush1.bf16.msra.mxu0 %v731
    %917 = vmatprep.subr.bf16.mxu0 %v740
    %918 = vmatpush1.bf16.msra.mxu0 %v739
    %919 = vmatprep.subr.bf16.mxu0 %v748
    %920 = vmatpush1.bf16.msra.mxu0 %v747
    %921 = vmatprep.subr.bf16.mxu0 %v756
    %922 = vmatpush1.bf16.msra.mxu0 %v755
    %923 = vmatprep.mubr.bf16.mxu0 %v248
    %924 = vmatmul.mubr.bf16.gmra.mrb[0].mxu0 %v247
    %v925 = vpop.f32.mrb[0].mxu0
    %v926 = vadd.f32 0.0, %v925
    %v927 = vpop.f32.mrb[0].mxu0
    %v928 = vadd.f32 0.0, %v927
    %v929 = vpop.f32.mrb[0].mxu0
    %v930 = vadd.f32 0.0, %v929
    %v931 = vpop.f32.mrb[0].mxu0
    %v932 = vadd.f32 0.0, %v931
    %933 = vdwg.mxu0
    %934 = vmatprep.subr.bf16.mxu0 %v638
    %935 = vmatpush1.bf16.msra.mxu0 %v637
    %936 = vmatprep.subr.bf16.mxu0 %v646
    %937 = vmatpush1.bf16.msra.mxu0 %v645
    %938 = vmatprep.subr.bf16.mxu0 %v654
    %939 = vmatpush1.bf16.msra.mxu0 %v653
    %940 = vmatprep.subr.bf16.mxu0 %v662
    %941 = vmatpush1.bf16.msra.mxu0 %v661
    %942 = vmatprep.subr.bf16.mxu0 %v670
    %943 = vmatpush1.bf16.msra.mxu0 %v669
    %944 = vmatprep.subr.bf16.mxu0 %v678
    %945 = vmatpush1.bf16.msra.mxu0 %v677
    %946 = vmatprep.subr.bf16.mxu0 %v686
    %947 = vmatpush1.bf16.msra.mxu0 %v685
    %948 = vmatprep.subr.bf16.mxu0 %v694
    %949 = vmatpush1.bf16.msra.mxu0 %v693
    %950 = vmatprep.subr.bf16.mxu0 %v702
    %951 = vmatpush1.bf16.msra.mxu0 %v701
    %952 = vmatprep.subr.bf16.mxu0 %v710
    %953 = vmatpush1.bf16.msra.mxu0 %v709
    %954 = vmatprep.subr.bf16.mxu0 %v718
    %955 = vmatpush1.bf16.msra.mxu0 %v717
    %956 = vmatprep.subr.bf16.mxu0 %v726
    %957 = vmatpush1.bf16.msra.mxu0 %v725
    %958 = vmatprep.subr.bf16.mxu0 %v734
    %959 = vmatpush1.bf16.msra.mxu0 %v733
    %960 = vmatprep.subr.bf16.mxu0 %v742
    %961 = vmatpush1.bf16.msra.mxu0 %v741
    %962 = vmatprep.subr.bf16.mxu0 %v750
    %963 = vmatpush1.bf16.msra.mxu0 %v749
    %964 = vmatprep.subr.bf16.mxu0 %v758
    %965 = vmatpush1.bf16.msra.mxu0 %v757
    %966 = vmatprep.mubr.bf16.mxu0 %v248
    %967 = vmatmul.mubr.bf16.gmra.mrb[0].mxu0 %v247
    %v968 = vpop.f32.mrb[0].mxu0
    %v969 = vadd.f32 0.0, %v968
    %v970 = vpop.f32.mrb[0].mxu0
    %v971 = vadd.f32 0.0, %v970
    %v972 = vpop.f32.mrb[0].mxu0
    %v973 = vadd.f32 0.0, %v972
    %v974 = vpop.f32.mrb[0].mxu0
    %v975 = vadd.f32 0.0, %v974
    %976 = vdwg.mxu0
    %977 = vmatprep.subr.bf16.mxu0 %v640
    %978 = vmatpush1.bf16.msra.mxu0 %v639
    %979 = vmatprep.subr.bf16.mxu0 %v648
    %980 = vmatpush1.bf16.msra.mxu0 %v647
    %981 = vmatprep.subr.bf16.mxu0 %v656
    %982 = vmatpush1.bf16.msra.mxu0 %v655
    %983 = vmatprep.subr.bf16.mxu0 %v664
    %984 = vmatpush1.bf16.msra.mxu0 %v663
    %985 = vmatprep.subr.bf16.mxu0 %v672
    %986 = vmatpush1.bf16.msra.mxu0 %v671
    %987 = vmatprep.subr.bf16.mxu0 %v680
    %988 = vmatpush1.bf16.msra.mxu0 %v679
    %989 = vmatprep.subr.bf16.mxu0 %v688
    %990 = vmatpush1.bf16.msra.mxu0 %v687
    %991 = vmatprep.subr.bf16.mxu0 %v696
    %992 = vmatpush1.bf16.msra.mxu0 %v695
    %993 = vmatprep.subr.bf16.mxu0 %v704
    %994 = vmatpush1.bf16.msra.mxu0 %v703
    %995 = vmatprep.subr.bf16.mxu0 %v712
    %996 = vmatpush1.bf16.msra.mxu0 %v711
    %997 = vmatprep.subr.bf16.mxu0 %v720
    %998 = vmatpush1.bf16.msra.mxu0 %v719
    %999 = vmatprep.subr.bf16.mxu0 %v728
    %1000 = vmatpush1.bf16.msra.mxu0 %v727
    %1001 = vmatprep.subr.bf16.mxu0 %v736
    %1002 = vmatpush1.bf16.msra.mxu0 %v735
    %1003 = vmatprep.subr.bf16.mxu0 %v744
    %1004 = vmatpush1.bf16.msra.mxu0 %v743
    %1005 = vmatprep.subr.bf16.mxu0 %v752
    %1006 = vmatpush1.bf16.msra.mxu0 %v751
    %1007 = vmatprep.subr.bf16.mxu0 %v760
    %1008 = vmatpush1.bf16.msra.mxu0 %v759
    %1009 = vmatprep.mubr.bf16.mxu0 %v248
    %1010 = vmatmul.mubr.bf16.gmra.mrb[0].mxu0 %v247
    %v1011 = vpop.f32.mrb[0].mxu0
    %v1012 = vadd.f32 0.0, %v1011
    %v1013 = vpop.f32.mrb[0].mxu0
    %v1014 = vadd.f32 0.0, %v1013
    %v1015 = vpop.f32.mrb[0].mxu0
    %v1016 = vadd.f32 0.0, %v1015
    %v1017 = vpop.f32.mrb[0].mxu0
    %v1018 = vadd.f32 0.0, %v1017
    %1019 = vdwg.mxu0
    %1020 = vmatprep.subr.bf16.mxu0 %v642
    %1021 = vmatpush1.bf16.msra.mxu0 %v641
    %1022 = vmatprep.subr.bf16.mxu0 %v650
    %1023 = vmatpush1.bf16.msra.mxu0 %v649
    %1024 = vmatprep.subr.bf16.mxu0 %v658
    %1025 = vmatpush1.bf16.msra.mxu0 %v657
    %1026 = vmatprep.subr.bf16.mxu0 %v666
    %1027 = vmatpush1.bf16.msra.mxu0 %v665
    %1028 = vmatprep.subr.bf16.mxu0 %v674
    %1029 = vmatpush1.bf16.msra.mxu0 %v673
    %1030 = vmatprep.subr.bf16.mxu0 %v682
    %1031 = vmatpush1.bf16.msra.mxu0 %v681
    %1032 = vmatprep.subr.bf16.mxu0 %v690
    %1033 = vmatpush1.bf16.msra.mxu0 %v689
    %1034 = vmatprep.subr.bf16.mxu0 %v698
    %1035 = vmatpush1.bf16.msra.mxu0 %v697
    %1036 = vmatprep.subr.bf16.mxu0 %v706
    %1037 = vmatpush1.bf16.msra.mxu0 %v705
    %1038 = vmatprep.subr.bf16.mxu0 %v714
    %1039 = vmatpush1.bf16.msra.mxu0 %v713
    %1040 = vmatprep.subr.bf16.mxu0 %v722
    %1041 = vmatpush1.bf16.msra.mxu0 %v721
    %1042 = vmatprep.subr.bf16.mxu0 %v730
    %1043 = vmatpush1.bf16.msra.mxu0 %v729
    %1044 = vmatprep.subr.bf16.mxu0 %v738
    %1045 = vmatpush1.bf16.msra.mxu0 %v737
    %1046 = vmatprep.subr.bf16.mxu0 %v746
    %1047 = vmatpush1.bf16.msra.mxu0 %v745
    %1048 = vmatprep.subr.bf16.mxu0 %v754
    %1049 = vmatpush1.bf16.msra.mxu0 %v753
    %1050 = vmatprep.subr.bf16.mxu0 %v762
    %1051 = vmatpush1.bf16.msra.mxu0 %v761
    %1052 = vmatprep.mubr.bf16.mxu0 %v248
    %1053 = vmatmul.mubr.bf16.gmra.mrb[0].mxu0 %v247
    %v1054 = vpop.f32.mrb[0].mxu0
    %v1055 = vadd.f32 0.0, %v1054
    %v1056 = vpop.f32.mrb[0].mxu0
    %v1057 = vadd.f32 0.0, %v1056
    %v1058 = vpop.f32.mrb[0].mxu0
    %v1059 = vadd.f32 0.0, %v1058
    %v1060 = vpop.f32.mrb[0].mxu0
    %v1061 = vadd.f32 0.0, %v1060
    %1062 = vdwg.mxu0
    %v1063 = vadd.f32 %v95, %v926
    %v1064 = vadd.f32 %v96, %v928
    %v1065 = vadd.f32 %v97, %v969
    %v1066 = vadd.f32 %v98, %v971
    %v1067 = vadd.f32 %v99, %v1012
    %v1068 = vadd.f32 %v100, %v1014
    %v1069 = vadd.f32 %v101, %v1055
    %v1070 = vadd.f32 %v102, %v1057
    %v1071 = vadd.f32 %v103, %v930
    %v1072 = vadd.f32 %v104, %v932
    %v1073 = vadd.f32 %v105, %v973
    %v1074 = vadd.f32 %v106, %v975
    %v1075 = vadd.f32 %v107, %v1016
    %v1076 = vadd.f32 %v108, %v1018
    %v1077 = vadd.f32 %v109, %v1059
    %v1078 = vadd.f32 %v110, %v1061
    %1079 = vst [vmem:[#allocation2] sm:$0xff] %v1063
    %1080 = vst [vmem:[#allocation2 + $0x8] sm:$0xff] %v1064
    %1081 = vst [vmem:[#allocation2 + $0x10] sm:$0xff] %v1065
    %1082 = vst [vmem:[#allocation2 + $0x18] sm:$0xff] %v1066
    %1083 = vst [vmem:[#allocation2 + $0x20] sm:$0xff] %v1067
    %1084 = vst [vmem:[#allocation2 + $0x28] sm:$0xff] %v1068
    %1085 = vst [vmem:[#allocation2 + $0x30] sm:$0xff] %v1069
    %1086 = vst [vmem:[#allocation2 + $0x38] sm:$0xff] %v1070
    %1087 = vst [vmem:[#allocation2 + $0x40] sm:$0xff] %v1071
    %1088 = vst [vmem:[#allocation2 + $0x48] sm:$0xff] %v1072
    %1089 = vst [vmem:[#allocation2 + $0x50] sm:$0xff] %v1073
    %1090 = vst [vmem:[#allocation2 + $0x58] sm:$0xff] %v1074
    %1091 = vst [vmem:[#allocation2 + $0x60] sm:$0xff] %v1075
    %1092 = vst [vmem:[#allocation2 + $0x68] sm:$0xff] %v1076
    %1093 = vst [vmem:[#allocation2 + $0x70] sm:$0xff] %v1077
    %1094 = vst [vmem:[#allocation2 + $0x78] sm:$0xff] %v1078
    // Predicated region
    $region42: #{tpu_custom_call.1} parent=1 // pred_check
      %p1095 = pneg %p75
    $region43: #{tpu_custom_call.1} parent=1 // pred_check_branch
      %1097 = sbr.rel (%p1095) target = $region45
    $region44: #{tpu_custom_call.1} parent=1 // pred_region
      %v1098 = vld [vmem:[#allocation2] sm:$0xff]
      %v1099 = vld [vmem:[#allocation2 + $0x8] sm:$0xff]
      %v1100 = vld [vmem:[#allocation2 + $0x10] sm:$0xff]
      %v1101 = vld [vmem:[#allocation2 + $0x18] sm:$0xff]
      %v1102 = vld [vmem:[#allocation2 + $0x20] sm:$0xff]
      %v1103 = vld [vmem:[#allocation2 + $0x28] sm:$0xff]
      %v1104 = vld [vmem:[#allocation2 + $0x30] sm:$0xff]
      %v1105 = vld [vmem:[#allocation2 + $0x38] sm:$0xff]
      %v1106 = vld [vmem:[#allocation2 + $0x40] sm:$0xff]
      %v1107 = vld [vmem:[#allocation2 + $0x48] sm:$0xff]
      %v1108 = vld [vmem:[#allocation2 + $0x50] sm:$0xff]
      %v1109 = vld [vmem:[#allocation2 + $0x58] sm:$0xff]
      %v1110 = vld [vmem:[#allocation2 + $0x60] sm:$0xff]
      %v1111 = vld [vmem:[#allocation2 + $0x68] sm:$0xff]
      %v1112 = vld [vmem:[#allocation2 + $0x70] sm:$0xff]
      %v1113 = vld [vmem:[#allocation2 + $0x78] sm:$0xff]
      %v1114 = vld [vmem:[#allocation8] sm:$0xff]
      %v1116 = vlaneseq
      %v1117 = vshrl.u32 %v1116, 7
      %v1118 = vsub.s32 0, %v1117
      %v1119 = vrot.slane %v1114, %v1118
      %v1120 = vlaneseq
      %v1121 = vshrl.u32 %v1120, 7
      %v1122 = vsub.s32 1, %v1121
      %v1123 = vrot.slane %v1114, %v1122
      %v1124 = vlaneseq
      %v1125 = vshrl.u32 %v1124, 7
      %v1126 = vsub.s32 2, %v1125
      %v1127 = vrot.slane %v1114, %v1126
      %v1128 = vlaneseq
      %v1129 = vshrl.u32 %v1128, 7
      %v1130 = vsub.s32 3, %v1129
      %v1131 = vrot.slane %v1114, %v1130
      %v1132 = vlaneseq
      %v1133 = vshrl.u32 %v1132, 7
      %v1134 = vsub.s32 4, %v1133
      %v1135 = vrot.slane %v1114, %v1134
      %v1136 = vlaneseq
      %v1137 = vshrl.u32 %v1136, 7
      %v1138 = vsub.s32 5, %v1137
      %v1139 = vrot.slane %v1114, %v1138
      %v1140 = vlaneseq
      %v1141 = vshrl.u32 %v1140, 7
      %v1142 = vsub.s32 6, %v1141
      %v1143 = vrot.slane %v1114, %v1142
      %v1144 = vlaneseq
      %v1145 = vshrl.u32 %v1144, 7
      %v1146 = vsub.s32 7, %v1145
      %v1147 = vrot.slane %v1114, %v1146
      %v1156 = vadd.f32 %v1098, %v1119
      %v1157 = vadd.f32 %v1099, %v1123
      %v1158 = vadd.f32 %v1100, %v1127
      %v1159 = vadd.f32 %v1101, %v1131
      %v1160 = vadd.f32 %v1102, %v1135
      %v1161 = vadd.f32 %v1103, %v1139
      %v1162 = vadd.f32 %v1104, %v1143
      %v1163 = vadd.f32 %v1105, %v1147
      %v1164 = vadd.f32 %v1106, %v1119
      %v1165 = vadd.f32 %v1107, %v1123
      %v1166 = vadd.f32 %v1108, %v1127
      %v1167 = vadd.f32 %v1109, %v1131
      %v1168 = vadd.f32 %v1110, %v1135
      %v1169 = vadd.f32 %v1111, %v1139
      %v1170 = vadd.f32 %v1112, %v1143
      %v1171 = vadd.f32 %v1113, %v1147
      %v1172 = vmax.f32 %v1156, 0.0
      %v1173 = vmax.f32 %v1157, 0.0
      %v1174 = vmax.f32 %v1158, 0.0
      %v1175 = vmax.f32 %v1159, 0.0
      %v1176 = vmax.f32 %v1160, 0.0
      %v1177 = vmax.f32 %v1161, 0.0
      %v1178 = vmax.f32 %v1162, 0.0
      %v1179 = vmax.f32 %v1163, 0.0
      %v1180 = vmax.f32 %v1164, 0.0
      %v1181 = vmax.f32 %v1165, 0.0
      %v1182 = vmax.f32 %v1166, 0.0
      %v1183 = vmax.f32 %v1167, 0.0
      %v1184 = vmax.f32 %v1168, 0.0
      %v1185 = vmax.f32 %v1169, 0.0
      %v1186 = vmax.f32 %v1170, 0.0
      %v1187 = vmax.f32 %v1171, 0.0
      %v1188 = vpack.c.bf16 %v1180, %v1172
      %v1189 = vpack.c.bf16 %v1181, %v1173
      %v1190 = vpack.c.bf16 %v1182, %v1174
      %v1191 = vpack.c.bf16 %v1183, %v1175
      %v1192 = vpack.c.bf16 %v1184, %v1176
      %v1193 = vpack.c.bf16 %v1185, %v1177
      %v1194 = vpack.c.bf16 %v1186, %v1178
      %v1195 = vpack.c.bf16 %v1187, %v1179
      %v1196 = vld [vmem:[#allocation9] sm:$0xf]
      %v1197 = vld [vmem:[#allocation9 + $0x4] sm:$0xf]
      %v1198 = vld [vmem:[#allocation9 + $0x8] sm:$0xf]
      %v1199 = vld [vmem:[#allocation9 + $0xc] sm:$0xf]
      %v1200 = vld [vmem:[#allocation9 + $0x10] sm:$0xf]
      %v1201 = vld [vmem:[#allocation9 + $0x14] sm:$0xf]
      %v1202 = vld [vmem:[#allocation9 + $0x18] sm:$0xf]
      %v1203 = vld [vmem:[#allocation9 + $0x1c] sm:$0xf]
      %v1204 = vld [vmem:[#allocation9 + $0x20] sm:$0xf]
      %v1205 = vld [vmem:[#allocation9 + $0x24] sm:$0xf]
      %v1206 = vld [vmem:[#allocation9 + $0x28] sm:$0xf]
      %v1207 = vld [vmem:[#allocation9 + $0x2c] sm:$0xf]
      %v1208 = vld [vmem:[#allocation9 + $0x30] sm:$0xf]
      %v1209 = vld [vmem:[#allocation9 + $0x34] sm:$0xf]
      %v1210 = vld [vmem:[#allocation9 + $0x38] sm:$0xf]
      %v1211 = vld [vmem:[#allocation9 + $0x3c] sm:$0xf]
      %v1212 = vld [vmem:[#allocation9 + $0x40] sm:$0xf]
      %v1213 = vld [vmem:[#allocation9 + $0x44] sm:$0xf]
      %v1214 = vld [vmem:[#allocation9 + $0x48] sm:$0xf]
      %v1215 = vld [vmem:[#allocation9 + $0x4c] sm:$0xf]
      %v1216 = vld [vmem:[#allocation9 + $0x50] sm:$0xf]
      %v1217 = vld [vmem:[#allocation9 + $0x54] sm:$0xf]
      %v1218 = vld [vmem:[#allocation9 + $0x58] sm:$0xf]
      %v1219 = vld [vmem:[#allocation9 + $0x5c] sm:$0xf]
      %v1220 = vld [vmem:[#allocation9 + $0x60] sm:$0xf]
      %v1221 = vld [vmem:[#allocation9 + $0x64] sm:$0xf]
      %v1222 = vld [vmem:[#allocation9 + $0x68] sm:$0xf]
      %v1223 = vld [vmem:[#allocation9 + $0x6c] sm:$0xf]
      %v1224 = vld [vmem:[#allocation9 + $0x70] sm:$0xf]
      %v1225 = vld [vmem:[#allocation9 + $0x74] sm:$0xf]
      %v1226 = vld [vmem:[#allocation9 + $0x78] sm:$0xf]
      %v1227 = vld [vmem:[#allocation9 + $0x7c] sm:$0xf]
      %v1228 = vld [vmem:[#allocation9 + $0x80] sm:$0xf]
      %v1229 = vld [vmem:[#allocation9 + $0x84] sm:$0xf]
      %v1230 = vld [vmem:[#allocation9 + $0x88] sm:$0xf]
      %v1231 = vld [vmem:[#allocation9 + $0x8c] sm:$0xf]
      %v1232 = vld [vmem:[#allocation9 + $0x90] sm:$0xf]
      %v1233 = vld [vmem:[#allocation9 + $0x94] sm:$0xf]
      %v1234 = vld [vmem:[#allocation9 + $0x98] sm:$0xf]
      %v1235 = vld [vmem:[#allocation9 + $0x9c] sm:$0xf]
      %v1236 = vld [vmem:[#allocation9 + $0xa0] sm:$0xf]
      %v1237 = vld [vmem:[#allocation9 + $0xa4] sm:$0xf]
      %v1238 = vld [vmem:[#allocation9 + $0xa8] sm:$0xf]
      %v1239 = vld [vmem:[#allocation9 + $0xac] sm:$0xf]
      %v1240 = vld [vmem:[#allocation9 + $0xb0] sm:$0xf]
      %v1241 = vld [vmem:[#allocation9 + $0xb4] sm:$0xf]
      %v1242 = vld [vmem:[#allocation9 + $0xb8] sm:$0xf]
      %v1243 = vld [vmem:[#allocation9 + $0xbc] sm:$0xf]
      %v1244 = vld [vmem:[#allocation9 + $0xc0] sm:$0xf]
      %v1245 = vld [vmem:[#allocation9 + $0xc4] sm:$0xf]
      %v1246 = vld [vmem:[#allocation9 + $0xc8] sm:$0xf]
      %v1247 = vld [vmem:[#allocation9 + $0xcc] sm:$0xf]
      %v1248 = vld [vmem:[#allocation9 + $0xd0] sm:$0xf]
      %v1249 = vld [vmem:[#allocation9 + $0xd4] sm:$0xf]
      %v1250 = vld [vmem:[#allocation9 + $0xd8] sm:$0xf]
      %v1251 = vld [vmem:[#allocation9 + $0xdc] sm:$0xf]
      %v1252 = vld [vmem:[#allocation9 + $0xe0] sm:$0xf]
      %v1253 = vld [vmem:[#allocation9 + $0xe4] sm:$0xf]
      %v1254 = vld [vmem:[#allocation9 + $0xe8] sm:$0xf]
      %v1255 = vld [vmem:[#allocation9 + $0xec] sm:$0xf]
      %v1256 = vld [vmem:[#allocation9 + $0xf0] sm:$0xf]
      %v1257 = vld [vmem:[#allocation9 + $0xf4] sm:$0xf]
      %v1258 = vld [vmem:[#allocation9 + $0xf8] sm:$0xf]
      %v1259 = vld [vmem:[#allocation9 + $0xfc] sm:$0xf]
      %v1260 = vld [vmem:[#allocation9 + $0x100] sm:$0xf]
      %v1261 = vld [vmem:[#allocation9 + $0x104] sm:$0xf]
      %v1262 = vld [vmem:[#allocation9 + $0x108] sm:$0xf]
      %v1263 = vld [vmem:[#allocation9 + $0x10c] sm:$0xf]
      %v1264 = vld [vmem:[#allocation9 + $0x110] sm:$0xf]
      %v1265 = vld [vmem:[#allocation9 + $0x114] sm:$0xf]
      %v1266 = vld [vmem:[#allocation9 + $0x118] sm:$0xf]
      %v1267 = vld [vmem:[#allocation9 + $0x11c] sm:$0xf]
      %v1268 = vld [vmem:[#allocation9 + $0x120] sm:$0xf]
      %v1269 = vld [vmem:[#allocation9 + $0x124] sm:$0xf]
      %v1270 = vld [vmem:[#allocation9 + $0x128] sm:$0xf]
      %v1271 = vld [vmem:[#allocation9 + $0x12c] sm:$0xf]
      %v1272 = vld [vmem:[#allocation9 + $0x130] sm:$0xf]
      %v1273 = vld [vmem:[#allocation9 + $0x134] sm:$0xf]
      %v1274 = vld [vmem:[#allocation9 + $0x138] sm:$0xf]
      %v1275 = vld [vmem:[#allocation9 + $0x13c] sm:$0xf]
      %v1276 = vld [vmem:[#allocation9 + $0x140] sm:$0xf]
      %v1277 = vld [vmem:[#allocation9 + $0x144] sm:$0xf]
      %v1278 = vld [vmem:[#allocation9 + $0x148] sm:$0xf]
      %v1279 = vld [vmem:[#allocation9 + $0x14c] sm:$0xf]
      %v1280 = vld [vmem:[#allocation9 + $0x150] sm:$0xf]
      %v1281 = vld [vmem:[#allocation9 + $0x154] sm:$0xf]
      %v1282 = vld [vmem:[#allocation9 + $0x158] sm:$0xf]
      %v1283 = vld [vmem:[#allocation9 + $0x15c] sm:$0xf]
      %v1284 = vld [vmem:[#allocation9 + $0x160] sm:$0xf]
      %v1285 = vld [vmem:[#allocation9 + $0x164] sm:$0xf]
      %v1286 = vld [vmem:[#allocation9 + $0x168] sm:$0xf]
      %v1287 = vld [vmem:[#allocation9 + $0x16c] sm:$0xf]
      %v1288 = vld [vmem:[#allocation9 + $0x170] sm:$0xf]
      %v1289 = vld [vmem:[#allocation9 + $0x174] sm:$0xf]
      %v1290 = vld [vmem:[#allocation9 + $0x178] sm:$0xf]
      %v1291 = vld [vmem:[#allocation9 + $0x17c] sm:$0xf]
      %v1292 = vld [vmem:[#allocation9 + $0x180] sm:$0xf]
      %v1293 = vld [vmem:[#allocation9 + $0x184] sm:$0xf]
      %v1294 = vld [vmem:[#allocation9 + $0x188] sm:$0xf]
      %v1295 = vld [vmem:[#allocation9 + $0x18c] sm:$0xf]
      %v1296 = vld [vmem:[#allocation9 + $0x190] sm:$0xf]
      %v1297 = vld [vmem:[#allocation9 + $0x194] sm:$0xf]
      %v1298 = vld [vmem:[#allocation9 + $0x198] sm:$0xf]
      %v1299 = vld [vmem:[#allocation9 + $0x19c] sm:$0xf]
      %v1300 = vld [vmem:[#allocation9 + $0x1a0] sm:$0xf]
      %v1301 = vld [vmem:[#allocation9 + $0x1a4] sm:$0xf]
      %v1302 = vld [vmem:[#allocation9 + $0x1a8] sm:$0xf]
      %v1303 = vld [vmem:[#allocation9 + $0x1ac] sm:$0xf]
      %v1304 = vld [vmem:[#allocation9 + $0x1b0] sm:$0xf]
      %v1305 = vld [vmem:[#allocation9 + $0x1b4] sm:$0xf]
      %v1306 = vld [vmem:[#allocation9 + $0x1b8] sm:$0xf]
      %v1307 = vld [vmem:[#allocation9 + $0x1bc] sm:$0xf]
      %v1308 = vld [vmem:[#allocation9 + $0x1c0] sm:$0xf]
      %v1309 = vld [vmem:[#allocation9 + $0x1c4] sm:$0xf]
      %v1310 = vld [vmem:[#allocation9 + $0x1c8] sm:$0xf]
      %v1311 = vld [vmem:[#allocation9 + $0x1cc] sm:$0xf]
      %v1312 = vld [vmem:[#allocation9 + $0x1d0] sm:$0xf]
      %v1313 = vld [vmem:[#allocation9 + $0x1d4] sm:$0xf]
      %v1314 = vld [vmem:[#allocation9 + $0x1d8] sm:$0xf]
      %v1315 = vld [vmem:[#allocation9 + $0x1dc] sm:$0xf]
      %v1316 = vld [vmem:[#allocation9 + $0x1e0] sm:$0xf]
      %v1317 = vld [vmem:[#allocation9 + $0x1e4] sm:$0xf]
      %v1318 = vld [vmem:[#allocation9 + $0x1e8] sm:$0xf]
      %v1319 = vld [vmem:[#allocation9 + $0x1ec] sm:$0xf]
      %v1320 = vld [vmem:[#allocation9 + $0x1f0] sm:$0xf]
      %v1321 = vld [vmem:[#allocation9 + $0x1f4] sm:$0xf]
      %v1322 = vld [vmem:[#allocation9 + $0x1f8] sm:$0xf]
      %v1323 = vld [vmem:[#allocation9 + $0x1fc] sm:$0xf]
      %v1324 = vld [vmem:[%s4] sm:$0x1]
      %v1326 = vlaneseq
      %v1327 = vshrl.u32 %v1326, 7
      %v1328 = vsub.s32 0, %v1327
      %v1329 = vrot.slane %v1324, %v1328
      %v1459 = vunpack.c.l.b16 %v1196
      %v1460 = vunpack.c.l.b16 %v1197
      %v1461 = vunpack.c.l.b16 %v1198
      %v1462 = vunpack.c.l.b16 %v1199
      %v1463 = vunpack.c.l.b16 %v1200
      %v1464 = vunpack.c.l.b16 %v1201
      %v1465 = vunpack.c.l.b16 %v1202
      %v1466 = vunpack.c.l.b16 %v1203
      %v1467 = vunpack.c.l.b16 %v1204
      %v1468 = vunpack.c.l.b16 %v1205
      %v1469 = vunpack.c.l.b16 %v1206
      %v1470 = vunpack.c.l.b16 %v1207
      %v1471 = vunpack.c.l.b16 %v1208
      %v1472 = vunpack.c.l.b16 %v1209
      %v1473 = vunpack.c.l.b16 %v1210
      %v1474 = vunpack.c.l.b16 %v1211
      %v1475 = vunpack.c.l.b16 %v1212
      %v1476 = vunpack.c.l.b16 %v1213
      %v1477 = vunpack.c.l.b16 %v1214
      %v1478 = vunpack.c.l.b16 %v1215
      %v1479 = vunpack.c.l.b16 %v1216
      %v1480 = vunpack.c.l.b16 %v1217
      %v1481 = vunpack.c.l.b16 %v1218
      %v1482 = vunpack.c.l.b16 %v1219
      %v1483 = vunpack.c.l.b16 %v1220
      %v1484 = vunpack.c.l.b16 %v1221
      %v1485 = vunpack.c.l.b16 %v1222
      %v1486 = vunpack.c.l.b16 %v1223
      %v1487 = vunpack.c.l.b16 %v1224
      %v1488 = vunpack.c.l.b16 %v1225
      %v1489 = vunpack.c.l.b16 %v1226
      %v1490 = vunpack.c.l.b16 %v1227
      %v1491 = vunpack.c.l.b16 %v1228
      %v1492 = vunpack.c.l.b16 %v1229
      %v1493 = vunpack.c.l.b16 %v1230
      %v1494 = vunpack.c.l.b16 %v1231
      %v1495 = vunpack.c.l.b16 %v1232
      %v1496 = vunpack.c.l.b16 %v1233
      %v1497 = vunpack.c.l.b16 %v1234
      %v1498 = vunpack.c.l.b16 %v1235
      %v1499 = vunpack.c.l.b16 %v1236
      %v1500 = vunpack.c.l.b16 %v1237
      %v1501 = vunpack.c.l.b16 %v1238
      %v1502 = vunpack.c.l.b16 %v1239
      %v1503 = vunpack.c.l.b16 %v1240
      %v1504 = vunpack.c.l.b16 %v1241
      %v1505 = vunpack.c.l.b16 %v1242
      %v1506 = vunpack.c.l.b16 %v1243
      %v1507 = vunpack.c.l.b16 %v1244
      %v1508 = vunpack.c.l.b16 %v1245
      %v1509 = vunpack.c.l.b16 %v1246
      %v1510 = vunpack.c.l.b16 %v1247
      %v1511 = vunpack.c.l.b16 %v1248
      %v1512 = vunpack.c.l.b16 %v1249
      %v1513 = vunpack.c.l.b16 %v1250
      %v1514 = vunpack.c.l.b16 %v1251
      %v1515 = vunpack.c.l.b16 %v1252
      %v1516 = vunpack.c.l.b16 %v1253
      %v1517 = vunpack.c.l.b16 %v1254
      %v1518 = vunpack.c.l.b16 %v1255
      %v1519 = vunpack.c.l.b16 %v1256
      %v1520 = vunpack.c.l.b16 %v1257
      %v1521 = vunpack.c.l.b16 %v1258
      %v1522 = vunpack.c.l.b16 %v1259
      %v1523 = vunpack.c.l.b16 %v1260
      %v1524 = vunpack.c.l.b16 %v1261
      %v1525 = vunpack.c.l.b16 %v1262
      %v1526 = vunpack.c.l.b16 %v1263
      %v1527 = vunpack.c.l.b16 %v1264
      %v1528 = vunpack.c.l.b16 %v1265
      %v1529 = vunpack.c.l.b16 %v1266
      %v1530 = vunpack.c.l.b16 %v1267
      %v1531 = vunpack.c.l.b16 %v1268
      %v1532 = vunpack.c.l.b16 %v1269
      %v1533 = vunpack.c.l.b16 %v1270
      %v1534 = vunpack.c.l.b16 %v1271
      %v1535 = vunpack.c.l.b16 %v1272
      %v1536 = vunpack.c.l.b16 %v1273
      %v1537 = vunpack.c.l.b16 %v1274
      %v1538 = vunpack.c.l.b16 %v1275
      %v1539 = vunpack.c.l.b16 %v1276
      %v1540 = vunpack.c.l.b16 %v1277
      %v1541 = vunpack.c.l.b16 %v1278
      %v1542 = vunpack.c.l.b16 %v1279
      %v1543 = vunpack.c.l.b16 %v1280
      %v1544 = vunpack.c.l.b16 %v1281
      %v1545 = vunpack.c.l.b16 %v1282
      %v1546 = vunpack.c.l.b16 %v1283
      %v1547 = vunpack.c.l.b16 %v1284
      %v1548 = vunpack.c.l.b16 %v1285
      %v1549 = vunpack.c.l.b16 %v1286
      %v1550 = vunpack.c.l.b16 %v1287
      %v1551 = vunpack.c.l.b16 %v1288
      %v1552 = vunpack.c.l.b16 %v1289
      %v1553 = vunpack.c.l.b16 %v1290
      %v1554 = vunpack.c.l.b16 %v1291
      %v1555 = vunpack.c.l.b16 %v1292
      %v1556 = vunpack.c.l.b16 %v1293
      %v1557 = vunpack.c.l.b16 %v1294
      %v1558 = vunpack.c.l.b16 %v1295
      %v1559 = vunpack.c.l.b16 %v1296
      %v1560 = vunpack.c.l.b16 %v1297
      %v1561 = vunpack.c.l.b16 %v1298
      %v1562 = vunpack.c.l.b16 %v1299
      %v1563 = vunpack.c.l.b16 %v1300
      %v1564 = vunpack.c.l.b16 %v1301
      %v1565 = vunpack.c.l.b16 %v1302
      %v1566 = vunpack.c.l.b16 %v1303
      %v1567 = vunpack.c.l.b16 %v1304
      %v1568 = vunpack.c.l.b16 %v1305
      %v1569 = vunpack.c.l.b16 %v1306
      %v1570 = vunpack.c.l.b16 %v1307
      %v1571 = vunpack.c.l.b16 %v1308
      %v1572 = vunpack.c.l.b16 %v1309
      %v1573 = vunpack.c.l.b16 %v1310
      %v1574 = vunpack.c.l.b16 %v1311
      %v1575 = vunpack.c.l.b16 %v1312
      %v1576 = vunpack.c.l.b16 %v1313
      %v1577 = vunpack.c.l.b16 %v1314
      %v1578 = vunpack.c.l.b16 %v1315
      %v1579 = vunpack.c.l.b16 %v1316
      %v1580 = vunpack.c.l.b16 %v1317
      %v1581 = vunpack.c.l.b16 %v1318
      %v1582 = vunpack.c.l.b16 %v1319
      %v1583 = vunpack.c.l.b16 %v1320
      %v1584 = vunpack.c.l.b16 %v1321
      %v1585 = vunpack.c.l.b16 %v1322
      %v1586 = vunpack.c.l.b16 %v1323
      %v1587 = vpack.c.b16 %v1460, %v1459
      %v1588 = vpack.c.b16 %v1462, %v1461
      %v1589 = vpack.c.b16 %v1464, %v1463
      %v1590 = vpack.c.b16 %v1466, %v1465
      %v1591 = vpack.c.b16 %v1468, %v1467
      %v1592 = vpack.c.b16 %v1470, %v1469
      %v1593 = vpack.c.b16 %v1472, %v1471
      %v1594 = vpack.c.b16 %v1474, %v1473
      %v1595 = vpack.c.b16 %v1476, %v1475
      %v1596 = vpack.c.b16 %v1478, %v1477
      %v1597 = vpack.c.b16 %v1480, %v1479
      %v1598 = vpack.c.b16 %v1482, %v1481
      %v1599 = vpack.c.b16 %v1484, %v1483
      %v1600 = vpack.c.b16 %v1486, %v1485
      %v1601 = vpack.c.b16 %v1488, %v1487
      %v1602 = vpack.c.b16 %v1490, %v1489
      %v1603 = vpack.c.b16 %v1492, %v1491
      %v1604 = vpack.c.b16 %v1494, %v1493
      %v1605 = vpack.c.b16 %v1496, %v1495
      %v1606 = vpack.c.b16 %v1498, %v1497
      %v1607 = vpack.c.b16 %v1500, %v1499
      %v1608 = vpack.c.b16 %v1502, %v1501
      %v1609 = vpack.c.b16 %v1504, %v1503
      %v1610 = vpack.c.b16 %v1506, %v1505
      %v1611 = vpack.c.b16 %v1508, %v1507
      %v1612 = vpack.c.b16 %v1510, %v1509
      %v1613 = vpack.c.b16 %v1512, %v1511
      %v1614 = vpack.c.b16 %v1514, %v1513
      %v1615 = vpack.c.b16 %v1516, %v1515
      %v1616 = vpack.c.b16 %v1518, %v1517
      %v1617 = vpack.c.b16 %v1520, %v1519
      %v1618 = vpack.c.b16 %v1522, %v1521
      %v1619 = vpack.c.b16 %v1524, %v1523
      %v1620 = vpack.c.b16 %v1526, %v1525
      %v1621 = vpack.c.b16 %v1528, %v1527
      %v1622 = vpack.c.b16 %v1530, %v1529
      %v1623 = vpack.c.b16 %v1532, %v1531
      %v1624 = vpack.c.b16 %v1534, %v1533
      %v1625 = vpack.c.b16 %v1536, %v1535
      %v1626 = vpack.c.b16 %v1538, %v1537
      %v1627 = vpack.c.b16 %v1540, %v1539
      %v1628 = vpack.c.b16 %v1542, %v1541
      %v1629 = vpack.c.b16 %v1544, %v1543
      %v1630 = vpack.c.b16 %v1546, %v1545
      %v1631 = vpack.c.b16 %v1548, %v1547
      %v1632 = vpack.c.b16 %v1550, %v1549
      %v1633 = vpack.c.b16 %v1552, %v1551
      %v1634 = vpack.c.b16 %v1554, %v1553
      %v1635 = vpack.c.b16 %v1556, %v1555
      %v1636 = vpack.c.b16 %v1558, %v1557
      %v1637 = vpack.c.b16 %v1560, %v1559
      %v1638 = vpack.c.b16 %v1562, %v1561
      %v1639 = vpack.c.b16 %v1564, %v1563
      %v1640 = vpack.c.b16 %v1566, %v1565
      %v1641 = vpack.c.b16 %v1568, %v1567
      %v1642 = vpack.c.b16 %v1570, %v1569
      %v1643 = vpack.c.b16 %v1572, %v1571
      %v1644 = vpack.c.b16 %v1574, %v1573
      %v1645 = vpack.c.b16 %v1576, %v1575
      %v1646 = vpack.c.b16 %v1578, %v1577
      %v1647 = vpack.c.b16 %v1580, %v1579
      %v1648 = vpack.c.b16 %v1582, %v1581
      %v1649 = vpack.c.b16 %v1584, %v1583
      %v1650 = vpack.c.b16 %v1586, %v1585
      %1715 = vmatprep.subr.bf16.mxu0 0
      %1716 = vmatpush1.bf16.msra.mxu0 %v1587
      %1717 = vmatprep.subr.bf16.mxu0 0
      %1718 = vmatpush1.bf16.msra.mxu0 %v1588
      %1719 = vmatprep.subr.bf16.mxu0 0
      %1720 = vmatpush1.bf16.msra.mxu0 %v1589
      %1721 = vmatprep.subr.bf16.mxu0 0
      %1722 = vmatpush1.bf16.msra.mxu0 %v1590
      %1723 = vmatprep.subr.bf16.mxu0 0
      %1724 = vmatpush1.bf16.msra.mxu0 %v1591
      %1725 = vmatprep.subr.bf16.mxu0 0
      %1726 = vmatpush1.bf16.msra.mxu0 %v1592
      %1727 = vmatprep.subr.bf16.mxu0 0
      %1728 = vmatpush1.bf16.msra.mxu0 %v1593
      %1729 = vmatprep.subr.bf16.mxu0 0
      %1730 = vmatpush1.bf16.msra.mxu0 %v1594
      %1731 = vmatprep.subr.bf16.mxu0 0
      %1732 = vmatpush1.bf16.msra.mxu0 %v1595
      %1733 = vmatprep.subr.bf16.mxu0 0
      %1734 = vmatpush1.bf16.msra.mxu0 %v1596
      %1735 = vmatprep.subr.bf16.mxu0 0
      %1736 = vmatpush1.bf16.msra.mxu0 %v1597
      %1737 = vmatprep.subr.bf16.mxu0 0
      %1738 = vmatpush1.bf16.msra.mxu0 %v1598
      %1739 = vmatprep.subr.bf16.mxu0 0
      %1740 = vmatpush1.bf16.msra.mxu0 %v1599
      %1741 = vmatprep.subr.bf16.mxu0 0
      %1742 = vmatpush1.bf16.msra.mxu0 %v1600
      %1743 = vmatprep.subr.bf16.mxu0 0
      %1744 = vmatpush1.bf16.msra.mxu0 %v1601
      %1745 = vmatprep.subr.bf16.mxu0 0
      %1746 = vmatpush1.bf16.msra.mxu0 %v1602
      %1747 = vmatprep.mubr.bf16.mxu0 %v1189
      %1748 = vmatmul.mubr.bf16.gmra.mrb[0].mxu0 %v1188
      %v1749 = vpop.f32.mrb[0].mxu0
      %v1750 = vadd.f32 %v1329, %v1749
      %v1751 = vpop.f32.mrb[0].mxu0
      %v1752 = vpop.f32.mrb[0].mxu0
      %v1753 = vadd.f32 %v1329, %v1752
      %v1754 = vpop.f32.mrb[0].mxu0
      %1755 = vdwg.mxu0
      %1756 = vmatprep.subr.bf16.mxu0 0
      %1757 = vmatpush1.bf16.msra.mxu0 %v1603
      %1758 = vmatprep.subr.bf16.mxu0 0
      %1759 = vmatpush1.bf16.msra.mxu0 %v1604
      %1760 = vmatprep.subr.bf16.mxu0 0
      %1761 = vmatpush1.bf16.msra.mxu0 %v1605
      %1762 = vmatprep.subr.bf16.mxu0 0
      %1763 = vmatpush1.bf16.msra.mxu0 %v1606
      %1764 = vmatprep.subr.bf16.mxu0 0
      %1765 = vmatpush1.bf16.msra.mxu0 %v1607
      %1766 = vmatprep.subr.bf16.mxu0 0
      %1767 = vmatpush1.bf16.msra.mxu0 %v1608
      %1768 = vmatprep.subr.bf16.mxu0 0
      %1769 = vmatpush1.bf16.msra.mxu0 %v1609
      %1770 = vmatprep.subr.bf16.mxu0 0
      %1771 = vmatpush1.bf16.msra.mxu0 %v1610
      %1772 = vmatprep.subr.bf16.mxu0 0
      %1773 = vmatpush1.bf16.msra.mxu0 %v1611
      %1774 = vmatprep.subr.bf16.mxu0 0
      %1775 = vmatpush1.bf16.msra.mxu0 %v1612
      %1776 = vmatprep.subr.bf16.mxu0 0
      %1777 = vmatpush1.bf16.msra.mxu0 %v1613
      %1778 = vmatprep.subr.bf16.mxu0 0
      %1779 = vmatpush1.bf16.msra.mxu0 %v1614
      %1780 = vmatprep.subr.bf16.mxu0 0
      %1781 = vmatpush1.bf16.msra.mxu0 %v1615
      %1782 = vmatprep.subr.bf16.mxu0 0
      %1783 = vmatpush1.bf16.msra.mxu0 %v1616
      %1784 = vmatprep.subr.bf16.mxu0 0
      %1785 = vmatpush1.bf16.msra.mxu0 %v1617
      %1786 = vmatprep.subr.bf16.mxu0 0
      %1787 = vmatpush1.bf16.msra.mxu0 %v1618
      %1788 = vmatprep.mubr.bf16.mxu0 %v1191
      %1789 = vmatmul.mubr.bf16.gmra.mrb[0].mxu0 %v1190
      %v1790 = vpop.f32.mrb[0].mxu0
      %v1791 = vadd.f32 %v1750, %v1790
      %v1792 = vpop.f32.mrb[0].mxu0
      %v1793 = vpop.f32.mrb[0].mxu0
      %v1794 = vadd.f32 %v1753, %v1793
      %v1795 = vpop.f32.mrb[0].mxu0
      %1796 = vdwg.mxu0
      %1797 = vmatprep.subr.bf16.mxu0 0
      %1798 = vmatpush1.bf16.msra.mxu0 %v1619
      %1799 = vmatprep.subr.bf16.mxu0 0
      %1800 = vmatpush1.bf16.msra.mxu0 %v1620
      %1801 = vmatprep.subr.bf16.mxu0 0
      %1802 = vmatpush1.bf16.msra.mxu0 %v1621
      %1803 = vmatprep.subr.bf16.mxu0 0
      %1804 = vmatpush1.bf16.msra.mxu0 %v1622
      %1805 = vmatprep.subr.bf16.mxu0 0
      %1806 = vmatpush1.bf16.msra.mxu0 %v1623
      %1807 = vmatprep.subr.bf16.mxu0 0
      %1808 = vmatpush1.bf16.msra.mxu0 %v1624
      %1809 = vmatprep.subr.bf16.mxu0 0
      %1810 = vmatpush1.bf16.msra.mxu0 %v1625
      %1811 = vmatprep.subr.bf16.mxu0 0
      %1812 = vmatpush1.bf16.msra.mxu0 %v1626
      %1813 = vmatprep.subr.bf16.mxu0 0
      %1814 = vmatpush1.bf16.msra.mxu0 %v1627
      %1815 = vmatprep.subr.bf16.mxu0 0
      %1816 = vmatpush1.bf16.msra.mxu0 %v1628
      %1817 = vmatprep.subr.bf16.mxu0 0
      %1818 = vmatpush1.bf16.msra.mxu0 %v1629
      %1819 = vmatprep.subr.bf16.mxu0 0
      %1820 = vmatpush1.bf16.msra.mxu0 %v1630
      %1821 = vmatprep.subr.bf16.mxu0 0
      %1822 = vmatpush1.bf16.msra.mxu0 %v1631
      %1823 = vmatprep.subr.bf16.mxu0 0
      %1824 = vmatpush1.bf16.msra.mxu0 %v1632
      %1825 = vmatprep.subr.bf16.mxu0 0
      %1826 = vmatpush1.bf16.msra.mxu0 %v1633
      %1827 = vmatprep.subr.bf16.mxu0 0
      %1828 = vmatpush1.bf16.msra.mxu0 %v1634
      %1829 = vmatprep.mubr.bf16.mxu0 %v1193
      %1830 = vmatmul.mubr.bf16.gmra.mrb[0].mxu0 %v1192
      %v1831 = vpop.f32.mrb[0].mxu0
      %v1832 = vadd.f32 %v1791, %v1831
      %v1833 = vpop.f32.mrb[0].mxu0
      %v1834 = vpop.f32.mrb[0].mxu0
      %v1835 = vadd.f32 %v1794, %v1834
      %v1836 = vpop.f32.mrb[0].mxu0
      %1837 = vdwg.mxu0
      %1838 = vmatprep.subr.bf16.mxu0 0
      %1839 = vmatpush1.bf16.msra.mxu0 %v1635
      %1840 = vmatprep.subr.bf16.mxu0 0
      %1841 = vmatpush1.bf16.msra.mxu0 %v1636
      %1842 = vmatprep.subr.bf16.mxu0 0
      %1843 = vmatpush1.bf16.msra.mxu0 %v1637
      %1844 = vmatprep.subr.bf16.mxu0 0
      %1845 = vmatpush1.bf16.msra.mxu0 %v1638
      %1846 = vmatprep.subr.bf16.mxu0 0
      %1847 = vmatpush1.bf16.msra.mxu0 %v1639
      %1848 = vmatprep.subr.bf16.mxu0 0
      %1849 = vmatpush1.bf16.msra.mxu0 %v1640
      %1850 = vmatprep.subr.bf16.mxu0 0
      %1851 = vmatpush1.bf16.msra.mxu0 %v1641
      %1852 = vmatprep.subr.bf16.mxu0 0
      %1853 = vmatpush1.bf16.msra.mxu0 %v1642
      %1854 = vmatprep.subr.bf16.mxu0 0
      %1855 = vmatpush1.bf16.msra.mxu0 %v1643
      %1856 = vmatprep.subr.bf16.mxu0 0
      %1857 = vmatpush1.bf16.msra.mxu0 %v1644
      %1858 = vmatprep.subr.bf16.mxu0 0
      %1859 = vmatpush1.bf16.msra.mxu0 %v1645
      %1860 = vmatprep.subr.bf16.mxu0 0
      %1861 = vmatpush1.bf16.msra.mxu0 %v1646
      %1862 = vmatprep.subr.bf16.mxu0 0
      %1863 = vmatpush1.bf16.msra.mxu0 %v1647
      %1864 = vmatprep.subr.bf16.mxu0 0
      %1865 = vmatpush1.bf16.msra.mxu0 %v1648
      %1866 = vmatprep.subr.bf16.mxu0 0
      %1867 = vmatpush1.bf16.msra.mxu0 %v1649
      %1868 = vmatprep.subr.bf16.mxu0 0
      %1869 = vmatpush1.bf16.msra.mxu0 %v1650
      %1870 = vmatprep.mubr.bf16.mxu0 %v1195
      %1871 = vmatmul.mubr.bf16.gmra.mrb[0].mxu0 %v1194
      %v1872 = vpop.f32.mrb[0].mxu0
      %v1873 = vadd.f32 %v1832, %v1872
      %v1874 = vpop.f32.mrb[0].mxu0
      %v1875 = vpop.f32.mrb[0].mxu0
      %v1876 = vadd.f32 %v1835, %v1875
      %v1877 = vpop.f32.mrb[0].mxu0
      %1878 = vdwg.mxu0
      %1879 = vst [vmem:[#allocation11] sm:$0xff] %v1873
      %1880 = vst [vmem:[#allocation11 + $0x8] sm:$0xff] %v1876
    $region45: #{tpu_custom_call.1} parent=1 // pred_fallthru
      _
    // Predicated region
    $region46: #{tpu_custom_call.1} parent=1 // pred_check
      _
    $region47: #{tpu_custom_call.1} parent=1 // pred_check_branch
      %1882 = sbr.rel (0) target = $region49
    $region48: #{tpu_custom_call.1} parent=1 // pred_region
      %s1884 = ssub.s32 256, 256
      %1885 = vsyncadd [#allocation5], %s1884
      %s1886 = sshll.u32 [#allocation11], 4
      %s1887 = int_to_ptr.vmem [resolvable:$true] %s1886
      %1892 = dma.vmem_to_hbm [thread:$0]  %s1887, 256, %s5, [#allocation5], 128, 128, 8
    $region49: #{tpu_custom_call.1} parent=1 // pred_fallthru
      _
    // Predicated region
    $region50: #{tpu_custom_call.1} parent=1 // pred_check
      _
    $region51: #{tpu_custom_call.1} parent=1 // pred_check_branch
      %1894 = sbr.rel (0) target = $region53
    $region52: #{tpu_custom_call.1} parent=1 // pred_region
      %1895 = dma.done [#allocation5], 256
    $region53: #{tpu_custom_call.1} parent=1 // pred_fallthru
      _
    %1896 = vsyncpa [#allocation4], 1
    %1897 = vsyncpa [#allocation7], 1
    %1898 = vsyncpa [#allocation10], 1
    %1899 = vsyncpa [#allocation5], 1

</llo_original>
